<compile_context>
chip_gen: v6e
topology: v6e:2x2x1
jax: 0.10.0
libtpu: 0.0.40
codegen_flags: <defaults>
</compile_context>

<pallas_src>
import functools

import jax
import jax.numpy as jnp
from jax import lax
from jax.experimental import pallas as pl
from jax.experimental.pallas import tpu as pltpu


# --------------------------------- kernel ------------------------------------

def _mha_kernel(num_heads, has_mask, *refs):
    if has_mask:
        q_ref, wq_ref, kp_ref, vp_ref, wo_ref, bias_ref, out_ref = refs
    else:
        q_ref, wq_ref, kp_ref, vp_ref, wo_ref, out_ref = refs
        bias_ref = None

    H = num_heads
    dk = wq_ref.shape[1] // H
    dv = vp_ref.shape[1] // H
    D = wo_ref.shape[1]
    tq = q_ref.shape[0]

    bf16 = jnp.bfloat16
    f32 = jnp.float32

    # Q projection for this tile only (1/sqrt(dk) already folded into Wq).
    qp = jnp.dot(q_ref[...], wq_ref[...],
                 preferred_element_type=f32).astype(bf16)       # (tq, H*dk)

    kp = kp_ref[...]                                            # (Sk, H*dk) bf16
    vp = vp_ref[...]                                            # (Sk, H*dv) bf16
    wo = wo_ref[...]                                            # (H*dv, D) bf16
    bias = bias_ref[...].astype(f32) if has_mask else None      # (tq, Sk)

    # Per-head scaled-dot-product attention, fused with the output projection:
    #   out = sum_h softmax(q_h k_h^T + bias) v_h @ Wo[h*dv:(h+1)*dv, :]
    # The accumulator is lane-dense (D lanes) and written exactly once.
    acc = jnp.zeros((tq, D), f32)
    for h in range(H):                     # static unroll; H is small
        qh = qp[:, h * dk:(h + 1) * dk]                         # (tq, dk) bf16
        kh = kp[:, h * dk:(h + 1) * dk]                         # (Sk, dk) bf16
        vh = vp[:, h * dv:(h + 1) * dv]                         # (Sk, dv) bf16

        # q @ k^T without materializing a transposed copy of kh.
        s = lax.dot_general(qh, kh, (((1,), (1,)), ((), ())),
                            preferred_element_type=f32)         # (tq, Sk) f32
        if bias is not None:
            s = s + bias

        # Softmax over keys in f32; reciprocal goes to the EUP slot.
        m = jnp.max(s, axis=1, keepdims=True)
        e = jnp.exp(s - m)
        p = e * pl.reciprocal(jnp.sum(e, axis=1, keepdims=True), approx=True)

        head = jnp.dot(p.astype(bf16), vh,
                       preferred_element_type=f32).astype(bf16)  # (tq, dv)
        acc = acc + jnp.dot(head, wo[h * dv:(h + 1) * dv, :],
                            preferred_element_type=f32)          # (tq, D)

    out_ref[...] = acc.astype(out_ref.dtype)


# ------------------------------ sizing helpers --------------------------------

def _vmem_capacity_bytes():
    """Per-TensorCore VMEM capacity (generation aware), with a safe fallback."""
    try:
        cap = getattr(pltpu.get_tpu_info(), "vmem_capacity_bytes", None)
        if cap:
            return int(cap)
    except Exception:
        pass
    return 64 * 1024 * 1024   # conservative default = v7x per-TC VMEM


def _pick_q_tile(sq, sk, d, hdk, hdv, has_mask, vmem_cap):
    """Largest multiple-of-8 divisor of sq (<=1024) whose per-step working set
    fits ~80% of VMEM.  Falls back to sq itself if no such divisor exists."""
    budget = int(vmem_cap * 0.8)
    # Grid-constant residents (bf16); assume double-buffered in case the
    # Buffered(1) hint is not honoured.
    const_b = 2 * 2 * (sk * hdk + sk * hdv + d * hdk + hdv * d)
    avail = max(budget - const_b, 0)

    def step_bytes(t):
        b = 2 * t * d * 2               # q tile, bf16, double-buffered
        b += 2 * t * d * 4              # out tile, f32, double-buffered
        if has_mask:
            b += 2 * t * sk * 2         # bias tile, bf16, double-buffered
        b += t * sk * 4 + t * d * 4     # live f32 scores + accumulator
        return b

    best = sq if sq <= 8 else 8
    t = 8
    while t <= min(sq, 1024):
        if sq % t == 0 and step_bytes(t) <= avail:
            best = t
        t += 8
    if sq % best != 0:                  # e.g. prime / tiny Sq
        best = sq
    return best


def _additive_bias(mask_idx, sq, sk):
    """0 / -1e30 additive bias from the (2, M) PyTorch-style mask indices."""
    bias = jnp.zeros((sq, sk), jnp.float32)
    bias = bias.at[mask_idx[0], mask_idx[1]].set(-1e30)
    return bias.astype(jnp.bfloat16)


# -------------------------------- wrapper -------------------------------------

def multi_head_attention(query, key, value, wq, wk, wv, wo, mask_idx=None):
    """
    query:(Sq,D) key/value:(Sk,D), float32.
    wq/wk/wv: (H, D, dk) stacked per-head projection weights, pre-transposed so
              proj = x @ w[h]  (i.e. PyTorch Linear.weight.T).
    wo:       (H*dv, D) output projection, pre-transposed (out = concat @ wo).
    mask_idx: optional (2, M) int array of (row, col) pairs that the PyTorch
              module sets to -inf before the softmax.
    """
    Sq, D = query.shape
    Sk = key.shape[0]
    H, _, dk = wq.shape
    dv = wv.shape[-1]
    has_mask = mask_idx is not None

    bf16 = jnp.bfloat16
    f32 = jnp.float32

    # ---- host-side (plain XLA) weight prep + hoisted K/V projections ----
    # Per-head weights stacked along lanes -> each projection is ONE matmul.
    # The 1/sqrt(dk) scale is folded into Wq here (free: weights already being
    # reformatted host-side).
    wq_f = (jnp.transpose(wq, (1, 0, 2)).reshape(D, H * dk)
            * (dk ** -0.5)).astype(bf16)
    wk_f = jnp.transpose(wk, (1, 0, 2)).reshape(D, H * dk).astype(bf16)
    wv_f = jnp.transpose(wv, (1, 0, 2)).reshape(D, H * dv).astype(bf16)
    wo_b = wo.astype(bf16)                                      # (H*dv, D)

    q_b = query.astype(bf16)
    # K/V projections are identical for every q tile -> compute them ONCE here
    # instead of once per grid step (and per TensorCore) inside the kernel.
    kp = jnp.dot(key.astype(bf16), wk_f, preferred_element_type=f32).astype(bf16)
    vp = jnp.dot(value.astype(bf16), wv_f, preferred_element_type=f32).astype(bf16)

    vmem_cap = _vmem_capacity_bytes()
    tq = _pick_q_tile(Sq, Sk, D, H * dk, H * dv, has_mask, vmem_cap)
    grid = (Sq // tq,)

    args = [q_b, wq_f, kp, vp, wo_b]
    if has_mask:
        args.append(_additive_bias(mask_idx, Sq, Sk))

    def build(buffered_consts):
        def const_spec(shape):
            # Grid-constant operands: single-buffer them when supported so the
            # default double-buffering does not waste VMEM on data that never
            # changes across the grid.
            kw = {}
            if buffered_consts:
                kw["pipeline_mode"] = pl.Buffered(1)
            return pl.BlockSpec(shape, lambda i: (0, 0), **kw)

        in_specs = [
            pl.BlockSpec((tq, D), lambda i: (i, 0)),            # q tile (bf16)
            const_spec((D, H * dk)),                            # Wq (scaled)
            const_spec((Sk, H * dk)),                           # Kp (resident)
            const_spec((Sk, H * dv)),                           # Vp (resident)
            const_spec((H * dv, D)),                            # Wo
        ]
        if has_mask:
            in_specs.append(pl.BlockSpec((tq, Sk), lambda i: (i, 0)))  # bias

        grid_spec = pltpu.PrefetchScalarGridSpec(
            num_scalar_prefetch=0,
            grid=grid,
            in_specs=in_specs,
            out_specs=pl.BlockSpec((tq, D), lambda i: (i, 0)),
        )
        kernel = functools.partial(_mha_kernel, H, has_mask)
        return pl.pallas_call(
            kernel,
            out_shape=jax.ShapeDtypeStruct((Sq, D), jnp.float32),
            grid_spec=grid_spec,
            compiler_params=pltpu.CompilerParams(
                # Sq-tile axis is fully parallel; no in-kernel init so this is
                # safe under v7x megacore sharding.
                dimension_semantics=("parallel",),
                vmem_limit_bytes=(vmem_cap // 8) * 7,
            ),
        )

    try:
        out = build(True)(*args)
        return jax.block_until_ready(out)
    except Exception:
        # Installed Pallas rejected pipeline_mode=Buffered(1); retry without it.
        out = build(False)(*args)
        return jax.block_until_ready(out)


# ------------------------------- references -----------------------------------

def _reference_mixed(query, key, value, wq, wk, wv, wo, mask_idx=None):
    """Plain-JAX reference mirroring the kernel's precision policy
    (bf16 MXU operands, f32 accumulation & softmax, additive -1e30 mask,
    scale folded into Wq)."""
    bf16, f32 = jnp.bfloat16, jnp.float32
    H, D, dk = wq.shape
    dv = wv.shape[-1]
    Sq, Sk = query.shape[0], key.shape[0]
    wq_f = (jnp.transpose(wq, (1, 0, 2)).reshape(D, H * dk)
            * (dk ** -0.5)).astype(bf16)
    wk_f = jnp.transpose(wk, (1, 0, 2)).reshape(D, H * dk).astype(bf16)
    wv_f = jnp.transpose(wv, (1, 0, 2)).reshape(D, H * dv).astype(bf16)
    qp = jnp.dot(query.astype(bf16), wq_f, preferred_element_type=f32).astype(bf16)
    kp = jnp.dot(key.astype(bf16), wk_f, preferred_element_type=f32).astype(bf16)
    vp = jnp.dot(value.astype(bf16), wv_f, preferred_element_type=f32).astype(bf16)
    bias = (_additive_bias(mask_idx, Sq, Sk).astype(f32)
            if mask_idx is not None else None)
    heads = []
    for h in range(H):
        s = jnp.dot(qp[:, h * dk:(h + 1) * dk], kp[:, h * dk:(h + 1) * dk].T,
                    preferred_element_type=f32)
        if bias is not None:
            s = s + bias
        p = jax.nn.softmax(s, axis=1)
        heads.append(jnp.dot(p.astype(bf16), vp[:, h * dv:(h + 1) * dv],
                             preferred_element_type=f32))
    concat = jnp.concatenate(heads, axis=1).astype(bf16)
    return jnp.dot(concat, wo.astype(bf16), preferred_element_type=f32)


def _reference_f32(query, key, value, wq, wk, wv, wo, mask_idx=None):
    """Pure f32 re-implementation of the PyTorch forward."""
    H, _, dk = wq.shape
    heads = []
    for h in range(H):
        qp = query @ wq[h]
        kp = key @ wk[h]
        vp = value @ wv[h]
        s = (qp @ kp.T) / jnp.sqrt(jnp.float32(dk))
        if mask_idx is not None:
            s = s.at[mask_idx[0], mask_idx[1]].set(-jnp.inf)
        p = jax.nn.softmax(s, axis=1)
        heads.append(p @ vp)
    return jnp.concatenate(heads, axis=1) @ wo


# --------------------------------- demo ---------------------------------------

if __name__ == "__main__":
    # key_dim == val_dim == model_dim // num_heads (module asserts)
    num_heads, model_dim = 4, 32
    key_dim = val_dim = model_dim // num_heads   # 8
    seq = 8

    root = jax.random.PRNGKey(0)
    ks = jax.random.split(root, 8)

    query = jax.random.normal(ks[0], (seq, model_dim), jnp.float32)
    key_in = jax.random.normal(ks[1], (seq, model_dim), jnp.float32)
    value = jax.random.normal(ks[2], (seq, model_dim), jnp.float32)

    scale = 1.0 / jnp.sqrt(jnp.float32(model_dim))
    wq = jax.random.uniform(ks[3], (num_heads, model_dim, key_dim),
                            jnp.float32, -scale, scale)
    wk = jax.random.uniform(ks[4], (num_heads, model_dim, key_dim),
                            jnp.float32, -scale, scale)
    wv = jax.random.uniform(ks[5], (num_heads, model_dim, val_dim),
                            jnp.float32, -scale, scale)
    wo = jax.random.uniform(ks[6], (model_dim, model_dim),
                            jnp.float32, -scale, scale)

    # ---- unmasked path (mask=None in the PyTorch module) ----
    out = multi_head_attention(query, key_in, value, wq, wk, wv, wo,
                               mask_idx=None)
    out = jax.block_until_ready(out)
    assert out.shape == (seq, model_dim)
    assert jnp.allclose(out,
                        _reference_mixed(query, key_in, value, wq, wk, wv, wo),
                        atol=1e-2, rtol=1e-2)
    assert jnp.allclose(out,
                        _reference_f32(query, key_in, value, wq, wk, wv, wo),
                        atol=5e-2, rtol=5e-2)

    # ---- masked path (scaled[mask[0], mask[1]] = -inf) ----
    mask_idx = jnp.array([[0, 0, 1, 3, 5, 6, 7],
                          [1, 5, 2, 7, 0, 6, 3]], dtype=jnp.int32)
    out_m = multi_head_attention(query, key_in, value, wq, wk, wv, wo,
                                 mask_idx=mask_idx)
    out_m = jax.block_until_ready(out_m)
    assert jnp.allclose(out_m,
                        _reference_mixed(query, key_in, value, wq, wk, wv, wo,
                                         mask_idx),
                        atol=1e-2, rtol=1e-2)
    assert jnp.allclose(out_m,
                        _reference_f32(query, key_in, value, wq, wk, wv, wo,
                                       mask_idx),
                        atol=5e-2, rtol=5e-2)

    print("KERNEL_OK")
</pallas_src>

<mosaic_0001>
module attributes {stable_mosaic.version = 11 : i64} {
  func.func @_mha_kernel(%arg0: i32, %arg1: memref<8x32xbf16, #tpu.memory_space<vmem>>, %arg2: memref<32x32xbf16, #tpu.memory_space<vmem>>, %arg3: memref<8x32xbf16, #tpu.memory_space<vmem>>, %arg4: memref<8x32xbf16, #tpu.memory_space<vmem>>, %arg5: memref<32x32xbf16, #tpu.memory_space<vmem>>, %arg6: memref<8x32xf32, #tpu.memory_space<vmem>>) attributes {dimension_semantics = [#tpu.dimension_semantics<parallel>], iteration_bounds = array<i64: 1>, scalar_prefetch = 0 : i64, scratch_operands = 0 : i64, tpu.core_type = #tpu.core_type<tc>, window_params = [{transform_indices = @transform_0, window_bounds = array<i64: 8, 32>}, {pipeline_mode = #tpu.pipeline_mode<synchronous>, transform_indices = @transform_1, window_bounds = array<i64: 32, 32>}, {pipeline_mode = #tpu.pipeline_mode<synchronous>, transform_indices = @transform_2, window_bounds = array<i64: 8, 32>}, {pipeline_mode = #tpu.pipeline_mode<synchronous>, transform_indices = @transform_3, window_bounds = array<i64: 8, 32>}, {pipeline_mode = #tpu.pipeline_mode<synchronous>, transform_indices = @transform_4, window_bounds = array<i64: 32, 32>}, {transform_indices = @transform_5, window_bounds = array<i64: 8, 32>}]} {
    %c0 = arith.constant 0 : index
    %c0_0 = arith.constant 0 : index
    %0 = vector.load %arg1[%c0, %c0_0] : memref<8x32xbf16, #tpu.memory_space<vmem>>, vector<8x32xbf16>
    %c0_1 = arith.constant 0 : index
    %c0_2 = arith.constant 0 : index
    %1 = vector.load %arg2[%c0_1, %c0_2] : memref<32x32xbf16, #tpu.memory_space<vmem>>, vector<32x32xbf16>
    %cst = arith.constant dense<0.000000e+00> : vector<8x32xf32>
    %2 = tpu.matmul %0, %1, %cst {dimension_numbers = #tpu.dot_dimension_numbers<[1], [0], [0], [1], [0, 0, 1, 1], [], []>} : vector<8x32xbf16>, vector<32x32xbf16>, vector<8x32xf32> -> vector<8x32xf32>
    %3 = arith.truncf %2 : vector<8x32xf32> to vector<8x32xbf16>
    %c0_3 = arith.constant 0 : index
    %c0_4 = arith.constant 0 : index
    %4 = vector.load %arg3[%c0_3, %c0_4] : memref<8x32xbf16, #tpu.memory_space<vmem>>, vector<8x32xbf16>
    %c0_5 = arith.constant 0 : index
    %c0_6 = arith.constant 0 : index
    %5 = vector.load %arg4[%c0_5, %c0_6] : memref<8x32xbf16, #tpu.memory_space<vmem>>, vector<8x32xbf16>
    %c0_7 = arith.constant 0 : index
    %c0_8 = arith.constant 0 : index
    %6 = vector.load %arg5[%c0_7, %c0_8] : memref<32x32xbf16, #tpu.memory_space<vmem>>, vector<32x32xbf16>
    %cst_9 = arith.constant 0.000000e+00 : f32
    %7 = vector.broadcast %cst_9 : f32 to vector<8x32xf32>
    %8 = vector.extract_strided_slice %3 {offsets = [0, 0], sizes = [8, 8], strides = [1, 1]} : vector<8x32xbf16> to vector<8x8xbf16>
    %9 = vector.extract_strided_slice %4 {offsets = [0, 0], sizes = [8, 8], strides = [1, 1]} : vector<8x32xbf16> to vector<8x8xbf16>
    %10 = vector.extract_strided_slice %5 {offsets = [0, 0], sizes = [8, 8], strides = [1, 1]} : vector<8x32xbf16> to vector<8x8xbf16>
    %cst_10 = arith.constant dense<0.000000e+00> : vector<8x8xf32>
    %11 = tpu.matmul %8, %9, %cst_10 {dimension_numbers = #tpu.dot_dimension_numbers<[1], [1], [0], [0], [0, 0, 1, 0], [], []>} : vector<8x8xbf16>, vector<8x8xbf16>, vector<8x8xf32> -> vector<8x8xf32>
    %cst_11 = arith.constant dense<0xFF800000> : vector<8xf32>
    %12 = vector.multi_reduction <maximumf>, %11, %cst_11 [1] : vector<8x8xf32> to vector<8xf32>
    %13 = vector.shape_cast %12 : vector<8xf32> to vector<8x1xf32>
    %14 = vector.broadcast %13 : vector<8x1xf32> to vector<8x8xf32>
    %15 = arith.subf %11, %14 : vector<8x8xf32>
    %16 = math.exp %15 : vector<8x8xf32>
    %cst_12 = arith.constant dense<0.000000e+00> : vector<8xf32>
    %17 = vector.multi_reduction <add>, %16, %cst_12 [1] : vector<8x8xf32> to vector<8xf32>
    %18 = vector.shape_cast %17 : vector<8xf32> to vector<8x1xf32>
    %19 = tpu.reciprocal %18 {approx = true} : vector<8x1xf32> -> vector<8x1xf32>
    %20 = vector.broadcast %19 : vector<8x1xf32> to vector<8x8xf32>
    %21 = arith.mulf %16, %20 : vector<8x8xf32>
    %22 = arith.truncf %21 : vector<8x8xf32> to vector<8x8xbf16>
    %cst_13 = arith.constant dense<0.000000e+00> : vector<8x8xf32>
    %23 = tpu.matmul %22, %10, %cst_13 {dimension_numbers = #tpu.dot_dimension_numbers<[1], [0], [0], [1], [0, 0, 1, 1], [], []>} : vector<8x8xbf16>, vector<8x8xbf16>, vector<8x8xf32> -> vector<8x8xf32>
    %24 = arith.truncf %23 : vector<8x8xf32> to vector<8x8xbf16>
    %25 = vector.extract_strided_slice %6 {offsets = [0, 0], sizes = [8, 32], strides = [1, 1]} : vector<32x32xbf16> to vector<8x32xbf16>
    %cst_14 = arith.constant dense<0.000000e+00> : vector<8x32xf32>
    %26 = tpu.matmul %24, %25, %cst_14 {dimension_numbers = #tpu.dot_dimension_numbers<[1], [0], [0], [1], [0, 0, 1, 1], [], []>} : vector<8x8xbf16>, vector<8x32xbf16>, vector<8x32xf32> -> vector<8x32xf32>
    %27 = arith.addf %7, %26 : vector<8x32xf32>
    %28 = vector.extract_strided_slice %3 {offsets = [0, 8], sizes = [8, 8], strides = [1, 1]} : vector<8x32xbf16> to vector<8x8xbf16>
    %29 = vector.extract_strided_slice %4 {offsets = [0, 8], sizes = [8, 8], strides = [1, 1]} : vector<8x32xbf16> to vector<8x8xbf16>
    %30 = vector.extract_strided_slice %5 {offsets = [0, 8], sizes = [8, 8], strides = [1, 1]} : vector<8x32xbf16> to vector<8x8xbf16>
    %cst_15 = arith.constant dense<0.000000e+00> : vector<8x8xf32>
    %31 = tpu.matmul %28, %29, %cst_15 {dimension_numbers = #tpu.dot_dimension_numbers<[1], [1], [0], [0], [0, 0, 1, 0], [], []>} : vector<8x8xbf16>, vector<8x8xbf16>, vector<8x8xf32> -> vector<8x8xf32>
    %cst_16 = arith.constant dense<0xFF800000> : vector<8xf32>
    %32 = vector.multi_reduction <maximumf>, %31, %cst_16 [1] : vector<8x8xf32> to vector<8xf32>
    %33 = vector.shape_cast %32 : vector<8xf32> to vector<8x1xf32>
    %34 = vector.broadcast %33 : vector<8x1xf32> to vector<8x8xf32>
    %35 = arith.subf %31, %34 : vector<8x8xf32>
    %36 = math.exp %35 : vector<8x8xf32>
    %cst_17 = arith.constant dense<0.000000e+00> : vector<8xf32>
    %37 = vector.multi_reduction <add>, %36, %cst_17 [1] : vector<8x8xf32> to vector<8xf32>
    %38 = vector.shape_cast %37 : vector<8xf32> to vector<8x1xf32>
    %39 = tpu.reciprocal %38 {approx = true} : vector<8x1xf32> -> vector<8x1xf32>
    %40 = vector.broadcast %39 : vector<8x1xf32> to vector<8x8xf32>
    %41 = arith.mulf %36, %40 : vector<8x8xf32>
    %42 = arith.truncf %41 : vector<8x8xf32> to vector<8x8xbf16>
    %cst_18 = arith.constant dense<0.000000e+00> : vector<8x8xf32>
    %43 = tpu.matmul %42, %30, %cst_18 {dimension_numbers = #tpu.dot_dimension_numbers<[1], [0], [0], [1], [0, 0, 1, 1], [], []>} : vector<8x8xbf16>, vector<8x8xbf16>, vector<8x8xf32> -> vector<8x8xf32>
    %44 = arith.truncf %43 : vector<8x8xf32> to vector<8x8xbf16>
    %45 = vector.extract_strided_slice %6 {offsets = [8, 0], sizes = [8, 32], strides = [1, 1]} : vector<32x32xbf16> to vector<8x32xbf16>
    %cst_19 = arith.constant dense<0.000000e+00> : vector<8x32xf32>
    %46 = tpu.matmul %44, %45, %cst_19 {dimension_numbers = #tpu.dot_dimension_numbers<[1], [0], [0], [1], [0, 0, 1, 1], [], []>} : vector<8x8xbf16>, vector<8x32xbf16>, vector<8x32xf32> -> vector<8x32xf32>
    %47 = arith.addf %27, %46 : vector<8x32xf32>
    %48 = vector.extract_strided_slice %3 {offsets = [0, 16], sizes = [8, 8], strides = [1, 1]} : vector<8x32xbf16> to vector<8x8xbf16>
    %49 = vector.extract_strided_slice %4 {offsets = [0, 16], sizes = [8, 8], strides = [1, 1]} : vector<8x32xbf16> to vector<8x8xbf16>
    %50 = vector.extract_strided_slice %5 {offsets = [0, 16], sizes = [8, 8], strides = [1, 1]} : vector<8x32xbf16> to vector<8x8xbf16>
    %cst_20 = arith.constant dense<0.000000e+00> : vector<8x8xf32>
    %51 = tpu.matmul %48, %49, %cst_20 {dimension_numbers = #tpu.dot_dimension_numbers<[1], [1], [0], [0], [0, 0, 1, 0], [], []>} : vector<8x8xbf16>, vector<8x8xbf16>, vector<8x8xf32> -> vector<8x8xf32>
    %cst_21 = arith.constant dense<0xFF800000> : vector<8xf32>
    %52 = vector.multi_reduction <maximumf>, %51, %cst_21 [1] : vector<8x8xf32> to vector<8xf32>
    %53 = vector.shape_cast %52 : vector<8xf32> to vector<8x1xf32>
    %54 = vector.broadcast %53 : vector<8x1xf32> to vector<8x8xf32>
    %55 = arith.subf %51, %54 : vector<8x8xf32>
    %56 = math.exp %55 : vector<8x8xf32>
    %cst_22 = arith.constant dense<0.000000e+00> : vector<8xf32>
    %57 = vector.multi_reduction <add>, %56, %cst_22 [1] : vector<8x8xf32> to vector<8xf32>
    %58 = vector.shape_cast %57 : vector<8xf32> to vector<8x1xf32>
    %59 = tpu.reciprocal %58 {approx = true} : vector<8x1xf32> -> vector<8x1xf32>
    %60 = vector.broadcast %59 : vector<8x1xf32> to vector<8x8xf32>
    %61 = arith.mulf %56, %60 : vector<8x8xf32>
    %62 = arith.truncf %61 : vector<8x8xf32> to vector<8x8xbf16>
    %cst_23 = arith.constant dense<0.000000e+00> : vector<8x8xf32>
    %63 = tpu.matmul %62, %50, %cst_23 {dimension_numbers = #tpu.dot_dimension_numbers<[1], [0], [0], [1], [0, 0, 1, 1], [], []>} : vector<8x8xbf16>, vector<8x8xbf16>, vector<8x8xf32> -> vector<8x8xf32>
    %64 = arith.truncf %63 : vector<8x8xf32> to vector<8x8xbf16>
    %65 = vector.extract_strided_slice %6 {offsets = [16, 0], sizes = [8, 32], strides = [1, 1]} : vector<32x32xbf16> to vector<8x32xbf16>
    %cst_24 = arith.constant dense<0.000000e+00> : vector<8x32xf32>
    %66 = tpu.matmul %64, %65, %cst_24 {dimension_numbers = #tpu.dot_dimension_numbers<[1], [0], [0], [1], [0, 0, 1, 1], [], []>} : vector<8x8xbf16>, vector<8x32xbf16>, vector<8x32xf32> -> vector<8x32xf32>
    %67 = arith.addf %47, %66 : vector<8x32xf32>
    %68 = vector.extract_strided_slice %3 {offsets = [0, 24], sizes = [8, 8], strides = [1, 1]} : vector<8x32xbf16> to vector<8x8xbf16>
    %69 = vector.extract_strided_slice %4 {offsets = [0, 24], sizes = [8, 8], strides = [1, 1]} : vector<8x32xbf16> to vector<8x8xbf16>
    %70 = vector.extract_strided_slice %5 {offsets = [0, 24], sizes = [8, 8], strides = [1, 1]} : vector<8x32xbf16> to vector<8x8xbf16>
    %cst_25 = arith.constant dense<0.000000e+00> : vector<8x8xf32>
    %71 = tpu.matmul %68, %69, %cst_25 {dimension_numbers = #tpu.dot_dimension_numbers<[1], [1], [0], [0], [0, 0, 1, 0], [], []>} : vector<8x8xbf16>, vector<8x8xbf16>, vector<8x8xf32> -> vector<8x8xf32>
    %cst_26 = arith.constant dense<0xFF800000> : vector<8xf32>
    %72 = vector.multi_reduction <maximumf>, %71, %cst_26 [1] : vector<8x8xf32> to vector<8xf32>
    %73 = vector.shape_cast %72 : vector<8xf32> to vector<8x1xf32>
    %74 = vector.broadcast %73 : vector<8x1xf32> to vector<8x8xf32>
    %75 = arith.subf %71, %74 : vector<8x8xf32>
    %76 = math.exp %75 : vector<8x8xf32>
    %cst_27 = arith.constant dense<0.000000e+00> : vector<8xf32>
    %77 = vector.multi_reduction <add>, %76, %cst_27 [1] : vector<8x8xf32> to vector<8xf32>
    %78 = vector.shape_cast %77 : vector<8xf32> to vector<8x1xf32>
    %79 = tpu.reciprocal %78 {approx = true} : vector<8x1xf32> -> vector<8x1xf32>
    %80 = vector.broadcast %79 : vector<8x1xf32> to vector<8x8xf32>
    %81 = arith.mulf %76, %80 : vector<8x8xf32>
    %82 = arith.truncf %81 : vector<8x8xf32> to vector<8x8xbf16>
    %cst_28 = arith.constant dense<0.000000e+00> : vector<8x8xf32>
    %83 = tpu.matmul %82, %70, %cst_28 {dimension_numbers = #tpu.dot_dimension_numbers<[1], [0], [0], [1], [0, 0, 1, 1], [], []>} : vector<8x8xbf16>, vector<8x8xbf16>, vector<8x8xf32> -> vector<8x8xf32>
    %84 = arith.truncf %83 : vector<8x8xf32> to vector<8x8xbf16>
    %85 = vector.extract_strided_slice %6 {offsets = [24, 0], sizes = [8, 32], strides = [1, 1]} : vector<32x32xbf16> to vector<8x32xbf16>
    %cst_29 = arith.constant dense<0.000000e+00> : vector<8x32xf32>
    %86 = tpu.matmul %84, %85, %cst_29 {dimension_numbers = #tpu.dot_dimension_numbers<[1], [0], [0], [1], [0, 0, 1, 1], [], []>} : vector<8x8xbf16>, vector<8x32xbf16>, vector<8x32xf32> -> vector<8x32xf32>
    %87 = arith.addf %67, %86 : vector<8x32xf32>
    %c0_30 = arith.constant 0 : index
    %c0_31 = arith.constant 0 : index
    %88 = vector.load %arg6[%c0_30, %c0_31] : memref<8x32xf32, #tpu.memory_space<vmem>>, vector<8x32xf32>
    tpu.vector_store %arg6[%c0_30, %c0_31], %87 {strides = array<i32>} : memref<8x32xf32, #tpu.memory_space<vmem>>, vector<8x32xf32>,
    return
  }
  func.func @transform_0(%arg0: i32) -> (i32, i32) {
    %c0_i32 = arith.constant 0 : i32
    %c0_i32_0 = arith.constant 0 : i32
    return %arg0, %c0_i32 : i32, i32
  }
  func.func @transform_1(%arg0: i32) -> (i32, i32) {
    %c0_i32 = arith.constant 0 : i32
    %c0_i32_0 = arith.constant 0 : i32
    %c0_i32_1 = arith.constant 0 : i32
    return %c0_i32, %c0_i32_0 : i32, i32
  }
  func.func @transform_2(%arg0: i32) -> (i32, i32) {
    %c0_i32 = arith.constant 0 : i32
    %c0_i32_0 = arith.constant 0 : i32
    %c0_i32_1 = arith.constant 0 : i32
    return %c0_i32, %c0_i32_0 : i32, i32
  }
  func.func @transform_3(%arg0: i32) -> (i32, i32) {
    %c0_i32 = arith.constant 0 : i32
    %c0_i32_0 = arith.constant 0 : i32
    %c0_i32_1 = arith.constant 0 : i32
    return %c0_i32, %c0_i32_0 : i32, i32
  }
  func.func @transform_4(%arg0: i32) -> (i32, i32) {
    %c0_i32 = arith.constant 0 : i32
    %c0_i32_0 = arith.constant 0 : i32
    %c0_i32_1 = arith.constant 0 : i32
    return %c0_i32, %c0_i32_0 : i32, i32
  }
  func.func @transform_5(%arg0: i32) -> (i32, i32) {
    %c0_i32 = arith.constant 0 : i32
    %c0_i32_0 = arith.constant 0 : i32
    return %arg0, %c0_i32 : i32, i32
  }
}

module attributes {stable_mosaic.version = 11 : i64} {
  func.func @_mha_kernel(%arg0: i32, %arg1: memref<8x32xbf16, #tpu.memory_space<vmem>>, %arg2: memref<32x32xbf16, #tpu.memory_space<vmem>>, %arg3: memref<8x32xbf16, #tpu.memory_space<vmem>>, %arg4: memref<8x32xbf16, #tpu.memory_space<vmem>>, %arg5: memref<32x32xbf16, #tpu.memory_space<vmem>>, %arg6: memref<8x32xf32, #tpu.memory_space<vmem>>) attributes {dimension_semantics = [#tpu.dimension_semantics<parallel>], iteration_bounds = array<i64: 1>, scalar_prefetch = 0 : i64, scratch_operands = 0 : i64, tpu.core_type = #tpu.core_type<tc>, window_params = [{transform_indices = @transform_0, window_bounds = array<i64: 8, 32>}, {pipeline_mode = #tpu.pipeline_mode<synchronous>, transform_indices = @transform_1, window_bounds = array<i64: 32, 32>}, {pipeline_mode = #tpu.pipeline_mode<synchronous>, transform_indices = @transform_2, window_bounds = array<i64: 8, 32>}, {pipeline_mode = #tpu.pipeline_mode<synchronous>, transform_indices = @transform_3, window_bounds = array<i64: 8, 32>}, {pipeline_mode = #tpu.pipeline_mode<synchronous>, transform_indices = @transform_4, window_bounds = array<i64: 32, 32>}, {transform_indices = @transform_5, window_bounds = array<i64: 8, 32>}]} {
    %c0 = arith.constant 0 : index
    %c0_0 = arith.constant 0 : index
    %0 = vector.load %arg1[%c0, %c0_0] : memref<8x32xbf16, #tpu.memory_space<vmem>>, vector<8x32xbf16>
    %c0_1 = arith.constant 0 : index
    %c0_2 = arith.constant 0 : index
    %1 = vector.load %arg2[%c0_1, %c0_2] : memref<32x32xbf16, #tpu.memory_space<vmem>>, vector<32x32xbf16>
    %cst = arith.constant dense<0.000000e+00> : vector<8x32xf32>
    %2 = tpu.matmul %0, %1, %cst {dimension_numbers = #tpu.dot_dimension_numbers<[1], [0], [0], [1], [0, 0, 1, 1], [], []>} : vector<8x32xbf16>, vector<32x32xbf16>, vector<8x32xf32> -> vector<8x32xf32>
    %3 = arith.truncf %2 : vector<8x32xf32> to vector<8x32xbf16>
    %c0_3 = arith.constant 0 : index
    %c0_4 = arith.constant 0 : index
    %4 = vector.load %arg3[%c0_3, %c0_4] : memref<8x32xbf16, #tpu.memory_space<vmem>>, vector<8x32xbf16>
    %c0_5 = arith.constant 0 : index
    %c0_6 = arith.constant 0 : index
    %5 = vector.load %arg4[%c0_5, %c0_6] : memref<8x32xbf16, #tpu.memory_space<vmem>>, vector<8x32xbf16>
    %c0_7 = arith.constant 0 : index
    %c0_8 = arith.constant 0 : index
    %6 = vector.load %arg5[%c0_7, %c0_8] : memref<32x32xbf16, #tpu.memory_space<vmem>>, vector<32x32xbf16>
    %cst_9 = arith.constant 0.000000e+00 : f32
    %7 = vector.broadcast %cst_9 : f32 to vector<8x32xf32>
    %8 = vector.extract_strided_slice %3 {offsets = [0, 0], sizes = [8, 8], strides = [1, 1]} : vector<8x32xbf16> to vector<8x8xbf16>
    %9 = vector.extract_strided_slice %4 {offsets = [0, 0], sizes = [8, 8], strides = [1, 1]} : vector<8x32xbf16> to vector<8x8xbf16>
    %10 = vector.extract_strided_slice %5 {offsets = [0, 0], sizes = [8, 8], strides = [1, 1]} : vector<8x32xbf16> to vector<8x8xbf16>
    %cst_10 = arith.constant dense<0.000000e+00> : vector<8x8xf32>
    %11 = tpu.matmul %8, %9, %cst_10 {dimension_numbers = #tpu.dot_dimension_numbers<[1], [1], [0], [0], [0, 0, 1, 0], [], []>} : vector<8x8xbf16>, vector<8x8xbf16>, vector<8x8xf32> -> vector<8x8xf32>
    %cst_11 = arith.constant dense<0xFF800000> : vector<8xf32>
    %12 = vector.multi_reduction <maximumf>, %11, %cst_11 [1] : vector<8x8xf32> to vector<8xf32>
    %13 = vector.shape_cast %12 : vector<8xf32> to vector<8x1xf32>
    %14 = vector.broadcast %13 : vector<8x1xf32> to vector<8x8xf32>
    %15 = arith.subf %11, %14 : vector<8x8xf32>
    %16 = math.exp %15 : vector<8x8xf32>
    %cst_12 = arith.constant dense<0.000000e+00> : vector<8xf32>
    %17 = vector.multi_reduction <add>, %16, %cst_12 [1] : vector<8x8xf32> to vector<8xf32>
    %18 = vector.shape_cast %17 : vector<8xf32> to vector<8x1xf32>
    %19 = tpu.reciprocal %18 {approx = true} : vector<8x1xf32> -> vector<8x1xf32>
    %20 = vector.broadcast %19 : vector<8x1xf32> to vector<8x8xf32>
    %21 = arith.mulf %16, %20 : vector<8x8xf32>
    %22 = arith.truncf %21 : vector<8x8xf32> to vector<8x8xbf16>
    %cst_13 = arith.constant dense<0.000000e+00> : vector<8x8xf32>
    %23 = tpu.matmul %22, %10, %cst_13 {dimension_numbers = #tpu.dot_dimension_numbers<[1], [0], [0], [1], [0, 0, 1, 1], [], []>} : vector<8x8xbf16>, vector<8x8xbf16>, vector<8x8xf32> -> vector<8x8xf32>
    %24 = arith.truncf %23 : vector<8x8xf32> to vector<8x8xbf16>
    %25 = vector.extract_strided_slice %6 {offsets = [0, 0], sizes = [8, 32], strides = [1, 1]} : vector<32x32xbf16> to vector<8x32xbf16>
    %cst_14 = arith.constant dense<0.000000e+00> : vector<8x32xf32>
    %26 = tpu.matmul %24, %25, %cst_14 {dimension_numbers = #tpu.dot_dimension_numbers<[1], [0], [0], [1], [0, 0, 1, 1], [], []>} : vector<8x8xbf16>, vector<8x32xbf16>, vector<8x32xf32> -> vector<8x32xf32>
    %27 = arith.addf %7, %26 : vector<8x32xf32>
    %28 = vector.extract_strided_slice %3 {offsets = [0, 8], sizes = [8, 8], strides = [1, 1]} : vector<8x32xbf16> to vector<8x8xbf16>
    %29 = vector.extract_strided_slice %4 {offsets = [0, 8], sizes = [8, 8], strides = [1, 1]} : vector<8x32xbf16> to vector<8x8xbf16>
    %30 = vector.extract_strided_slice %5 {offsets = [0, 8], sizes = [8, 8], strides = [1, 1]} : vector<8x32xbf16> to vector<8x8xbf16>
    %cst_15 = arith.constant dense<0.000000e+00> : vector<8x8xf32>
    %31 = tpu.matmul %28, %29, %cst_15 {dimension_numbers = #tpu.dot_dimension_numbers<[1], [1], [0], [0], [0, 0, 1, 0], [], []>} : vector<8x8xbf16>, vector<8x8xbf16>, vector<8x8xf32> -> vector<8x8xf32>
    %cst_16 = arith.constant dense<0xFF800000> : vector<8xf32>
    %32 = vector.multi_reduction <maximumf>, %31, %cst_16 [1] : vector<8x8xf32> to vector<8xf32>
    %33 = vector.shape_cast %32 : vector<8xf32> to vector<8x1xf32>
    %34 = vector.broadcast %33 : vector<8x1xf32> to vector<8x8xf32>
    %35 = arith.subf %31, %34 : vector<8x8xf32>
    %36 = math.exp %35 : vector<8x8xf32>
    %cst_17 = arith.constant dense<0.000000e+00> : vector<8xf32>
    %37 = vector.multi_reduction <add>, %36, %cst_17 [1] : vector<8x8xf32> to vector<8xf32>
    %38 = vector.shape_cast %37 : vector<8xf32> to vector<8x1xf32>
    %39 = tpu.reciprocal %38 {approx = true} : vector<8x1xf32> -> vector<8x1xf32>
    %40 = vector.broadcast %39 : vector<8x1xf32> to vector<8x8xf32>
    %41 = arith.mulf %36, %40 : vector<8x8xf32>
    %42 = arith.truncf %41 : vector<8x8xf32> to vector<8x8xbf16>
    %cst_18 = arith.constant dense<0.000000e+00> : vector<8x8xf32>
    %43 = tpu.matmul %42, %30, %cst_18 {dimension_numbers = #tpu.dot_dimension_numbers<[1], [0], [0], [1], [0, 0, 1, 1], [], []>} : vector<8x8xbf16>, vector<8x8xbf16>, vector<8x8xf32> -> vector<8x8xf32>
    %44 = arith.truncf %43 : vector<8x8xf32> to vector<8x8xbf16>
    %45 = vector.extract_strided_slice %6 {offsets = [8, 0], sizes = [8, 32], strides = [1, 1]} : vector<32x32xbf16> to vector<8x32xbf16>
    %cst_19 = arith.constant dense<0.000000e+00> : vector<8x32xf32>
    %46 = tpu.matmul %44, %45, %cst_19 {dimension_numbers = #tpu.dot_dimension_numbers<[1], [0], [0], [1], [0, 0, 1, 1], [], []>} : vector<8x8xbf16>, vector<8x32xbf16>, vector<8x32xf32> -> vector<8x32xf32>
    %47 = arith.addf %27, %46 : vector<8x32xf32>
    %48 = vector.extract_strided_slice %3 {offsets = [0, 16], sizes = [8, 8], strides = [1, 1]} : vector<8x32xbf16> to vector<8x8xbf16>
    %49 = vector.extract_strided_slice %4 {offsets = [0, 16], sizes = [8, 8], strides = [1, 1]} : vector<8x32xbf16> to vector<8x8xbf16>
    %50 = vector.extract_strided_slice %5 {offsets = [0, 16], sizes = [8, 8], strides = [1, 1]} : vector<8x32xbf16> to vector<8x8xbf16>
    %cst_20 = arith.constant dense<0.000000e+00> : vector<8x8xf32>
    %51 = tpu.matmul %48, %49, %cst_20 {dimension_numbers = #tpu.dot_dimension_numbers<[1], [1], [0], [0], [0, 0, 1, 0], [], []>} : vector<8x8xbf16>, vector<8x8xbf16>, vector<8x8xf32> -> vector<8x8xf32>
    %cst_21 = arith.constant dense<0xFF800000> : vector<8xf32>
    %52 = vector.multi_reduction <maximumf>, %51, %cst_21 [1] : vector<8x8xf32> to vector<8xf32>
    %53 = vector.shape_cast %52 : vector<8xf32> to vector<8x1xf32>
    %54 = vector.broadcast %53 : vector<8x1xf32> to vector<8x8xf32>
    %55 = arith.subf %51, %54 : vector<8x8xf32>
    %56 = math.exp %55 : vector<8x8xf32>
    %cst_22 = arith.constant dense<0.000000e+00> : vector<8xf32>
    %57 = vector.multi_reduction <add>, %56, %cst_22 [1] : vector<8x8xf32> to vector<8xf32>
    %58 = vector.shape_cast %57 : vector<8xf32> to vector<8x1xf32>
    %59 = tpu.reciprocal %58 {approx = true} : vector<8x1xf32> -> vector<8x1xf32>
    %60 = vector.broadcast %59 : vector<8x1xf32> to vector<8x8xf32>
    %61 = arith.mulf %56, %60 : vector<8x8xf32>
    %62 = arith.truncf %61 : vector<8x8xf32> to vector<8x8xbf16>
    %cst_23 = arith.constant dense<0.000000e+00> : vector<8x8xf32>
    %63 = tpu.matmul %62, %50, %cst_23 {dimension_numbers = #tpu.dot_dimension_numbers<[1], [0], [0], [1], [0, 0, 1, 1], [], []>} : vector<8x8xbf16>, vector<8x8xbf16>, vector<8x8xf32> -> vector<8x8xf32>
    %64 = arith.truncf %63 : vector<8x8xf32> to vector<8x8xbf16>
    %65 = vector.extract_strided_slice %6 {offsets = [16, 0], sizes = [8, 32], strides = [1, 1]} : vector<32x32xbf16> to vector<8x32xbf16>
    %cst_24 = arith.constant dense<0.000000e+00> : vector<8x32xf32>
    %66 = tpu.matmul %64, %65, %cst_24 {dimension_numbers = #tpu.dot_dimension_numbers<[1], [0], [0], [1], [0, 0, 1, 1], [], []>} : vector<8x8xbf16>, vector<8x32xbf16>, vector<8x32xf32> -> vector<8x32xf32>
    %67 = arith.addf %47, %66 : vector<8x32xf32>
    %68 = vector.extract_strided_slice %3 {offsets = [0, 24], sizes = [8, 8], strides = [1, 1]} : vector<8x32xbf16> to vector<8x8xbf16>
    %69 = vector.extract_strided_slice %4 {offsets = [0, 24], sizes = [8, 8], strides = [1, 1]} : vector<8x32xbf16> to vector<8x8xbf16>
    %70 = vector.extract_strided_slice %5 {offsets = [0, 24], sizes = [8, 8], strides = [1, 1]} : vector<8x32xbf16> to vector<8x8xbf16>
    %cst_25 = arith.constant dense<0.000000e+00> : vector<8x8xf32>
    %71 = tpu.matmul %68, %69, %cst_25 {dimension_numbers = #tpu.dot_dimension_numbers<[1], [1], [0], [0], [0, 0, 1, 0], [], []>} : vector<8x8xbf16>, vector<8x8xbf16>, vector<8x8xf32> -> vector<8x8xf32>
    %cst_26 = arith.constant dense<0xFF800000> : vector<8xf32>
    %72 = vector.multi_reduction <maximumf>, %71, %cst_26 [1] : vector<8x8xf32> to vector<8xf32>
    %73 = vector.shape_cast %72 : vector<8xf32> to vector<8x1xf32>
    %74 = vector.broadcast %73 : vector<8x1xf32> to vector<8x8xf32>
    %75 = arith.subf %71, %74 : vector<8x8xf32>
    %76 = math.exp %75 : vector<8x8xf32>
    %cst_27 = arith.constant dense<0.000000e+00> : vector<8xf32>
    %77 = vector.multi_reduction <add>, %76, %cst_27 [1] : vector<8x8xf32> to vector<8xf32>
    %78 = vector.shape_cast %77 : vector<8xf32> to vector<8x1xf32>
    %79 = tpu.reciprocal %78 {approx = true} : vector<8x1xf32> -> vector<8x1xf32>
    %80 = vector.broadcast %79 : vector<8x1xf32> to vector<8x8xf32>
    %81 = arith.mulf %76, %80 : vector<8x8xf32>
    %82 = arith.truncf %81 : vector<8x8xf32> to vector<8x8xbf16>
    %cst_28 = arith.constant dense<0.000000e+00> : vector<8x8xf32>
    %83 = tpu.matmul %82, %70, %cst_28 {dimension_numbers = #tpu.dot_dimension_numbers<[1], [0], [0], [1], [0, 0, 1, 1], [], []>} : vector<8x8xbf16>, vector<8x8xbf16>, vector<8x8xf32> -> vector<8x8xf32>
    %84 = arith.truncf %83 : vector<8x8xf32> to vector<8x8xbf16>
    %85 = vector.extract_strided_slice %6 {offsets = [24, 0], sizes = [8, 32], strides = [1, 1]} : vector<32x32xbf16> to vector<8x32xbf16>
    %cst_29 = arith.constant dense<0.000000e+00> : vector<8x32xf32>
    %86 = tpu.matmul %84, %85, %cst_29 {dimension_numbers = #tpu.dot_dimension_numbers<[1], [0], [0], [1], [0, 0, 1, 1], [], []>} : vector<8x8xbf16>, vector<8x32xbf16>, vector<8x32xf32> -> vector<8x32xf32>
    %87 = arith.addf %67, %86 : vector<8x32xf32>
    %c0_30 = arith.constant 0 : index
    %c0_31 = arith.constant 0 : index
    %88 = vector.load %arg6[%c0_30, %c0_31] : memref<8x32xf32, #tpu.memory_space<vmem>>, vector<8x32xf32>
    tpu.vector_store %arg6[%c0_30, %c0_31], %87 {strides = array<i32>} : memref<8x32xf32, #tpu.memory_space<vmem>>, vector<8x32xf32>,
    return
  }
  func.func @transform_0(%arg0: i32) -> (i32, i32) {
    %c0_i32 = arith.constant 0 : i32
    %c0_i32_0 = arith.constant 0 : i32
    return %arg0, %c0_i32 : i32, i32
  }
  func.func @transform_1(%arg0: i32) -> (i32, i32) {
    %c0_i32 = arith.constant 0 : i32
    %c0_i32_0 = arith.constant 0 : i32
    %c0_i32_1 = arith.constant 0 : i32
    return %c0_i32, %c0_i32_0 : i32, i32
  }
  func.func @transform_2(%arg0: i32) -> (i32, i32) {
    %c0_i32 = arith.constant 0 : i32
    %c0_i32_0 = arith.constant 0 : i32
    %c0_i32_1 = arith.constant 0 : i32
    return %c0_i32, %c0_i32_0 : i32, i32
  }
  func.func @transform_3(%arg0: i32) -> (i32, i32) {
    %c0_i32 = arith.constant 0 : i32
    %c0_i32_0 = arith.constant 0 : i32
    %c0_i32_1 = arith.constant 0 : i32
    return %c0_i32, %c0_i32_0 : i32, i32
  }
  func.func @transform_4(%arg0: i32) -> (i32, i32) {
    %c0_i32 = arith.constant 0 : i32
    %c0_i32_0 = arith.constant 0 : i32
    %c0_i32_1 = arith.constant 0 : i32
    return %c0_i32, %c0_i32_0 : i32, i32
  }
  func.func @transform_5(%arg0: i32) -> (i32, i32) {
    %c0_i32 = arith.constant 0 : i32
    %c0_i32_0 = arith.constant 0 : i32
    return %arg0, %c0_i32 : i32, i32
  }
}

</mosaic_0001>

<llo_original>
// kernel: tpu_custom_call.1
$region0: #{tpu_custom_call.1}
  #allocation0 [shape = 'u32[]', space=smem, size = 0x4, offset = 0x4, fixed_abs, tag = 'smem constant byte address 0x4 - core index']
  #allocation1 [shape = 'u32[144,128]{1,0:T(1,128)}', space=vmem, size = 0x12000, scoped, tag = 'internal scratch']
  %s0 = inlined_call_operand.hbm [shape: bf16[8,32], index: 0, kind: input, shape index: {}]
  %s1 = inlined_call_operand.hbm [shape: bf16[32,32], index: 1, kind: input, shape index: {}]
  %s2 = inlined_call_operand.hbm [shape: bf16[8,32], index: 2, kind: input, shape index: {}]
  %s3 = inlined_call_operand.vmem [shape: bf16[8,32], index: 3, kind: input, shape index: {}]
  %s4 = inlined_call_operand.hbm [shape: bf16[32,32], index: 4, kind: input, shape index: {}]
  %s5 = inlined_call_operand.hbm [shape: f32[8,32], index: 5, kind: output, shape index: {}]
  %s6 = sld [smem:[#allocation0]]
  $region46: #{tpu_custom_call.1} parent=0
    _
  %s8 = ssub.s32 1, %s6
  %s9 = scalar_select 0, %s8, %s6
  $region1: #{tpu_custom_call.1} parent=0
    #allocation2 [shape = 'u8[2048]{0}', space=vmem, size = 0x800, scoped, tag = 'input window, operand 0, single buffered']
    #allocation3 [shape = 's32[1]{0}', space=sflag, size = 0x4, scoped, tag = 'scoped memory for tpu_custom_call.1']
    #allocation4 [shape = 's32[1]{0}', space=sflag, size = 0x4, scoped, tag = 'scoped memory for tpu_custom_call.1']
    #allocation5 [shape = 'u8[8192]{0}', space=vmem, size = 0x2000, scoped, tag = 'input window, operand 1, single buffered']
    #allocation6 [shape = 's32[1]{0}', space=sflag, size = 0x4, scoped, tag = 'scoped memory for tpu_custom_call.1']
    #allocation7 [shape = 'u8[2048]{0}', space=vmem, size = 0x800, scoped, tag = 'input window, operand 2, single buffered']
    #allocation8 [shape = 'u8[8192]{0}', space=vmem, size = 0x2000, scoped, tag = 'input window, operand 4, single buffered']
    #allocation9 [shape = 's32[1]{0}', space=sflag, size = 0x4, scoped, tag = 'scoped memory for tpu_custom_call.1']
    #allocation10 [shape = 'u8[4096]{0}', space=vmem, size = 0x1000, scoped, tag = 'output window, operand 0, single buffered']
    %10 = vsyncpa [#allocation3], 0
    %11 = vsyncpa [#allocation6], 0
    %12 = vsyncpa [#allocation9], 0
    %13 = vsyncpa [#allocation4], 0
    // Predicated region
    $region2: #{tpu_custom_call.1} parent=1 // pred_check
      _
    $region3: #{tpu_custom_call.1} parent=1 // pred_check_branch
      %15 = sbr.rel (0) target = $region5
    $region4: #{tpu_custom_call.1} parent=1 // pred_region
      %s17 = ssub.s32 64, 64
      %18 = vsyncadd [#allocation3], %s17
      %s20 = sshll.u32 [#allocation2], 4
      %s21 = int_to_ptr.vmem [resolvable:$true] %s20
      %23 = dma.hbm_to_vmem [thread:$0]  %s0, 64, %s21, [#allocation3]
    $region5: #{tpu_custom_call.1} parent=1 // pred_fallthru
      _
    // Predicated region
    $region6: #{tpu_custom_call.1} parent=1 // pred_check
      _
    $region7: #{tpu_custom_call.1} parent=1 // pred_check_branch
      %25 = sbr.rel (0) target = $region9
    $region8: #{tpu_custom_call.1} parent=1 // pred_region
      %s27 = ssub.s32 256, 256
      %28 = vsyncadd [#allocation6], %s27
      %s29 = sshll.u32 [#allocation5], 4
      %s30 = int_to_ptr.vmem [resolvable:$true] %s29
      %35 = dma.hbm_to_vmem [thread:$0]  %s1, 256, %s30, [#allocation6], 64, 64, 4
    $region9: #{tpu_custom_call.1} parent=1 // pred_fallthru
      _
    // Predicated region
    $region10: #{tpu_custom_call.1} parent=1 // pred_check
      _
    $region11: #{tpu_custom_call.1} parent=1 // pred_check_branch
      %37 = sbr.rel (0) target = $region13
    $region12: #{tpu_custom_call.1} parent=1 // pred_region
      %s39 = ssub.s32 64, 64
      %40 = vsyncadd [#allocation6], %s39
      %s42 = sshll.u32 [#allocation7], 4
      %s43 = int_to_ptr.vmem [resolvable:$true] %s42
      %45 = dma.hbm_to_vmem [thread:$0]  %s2, 64, %s43, [#allocation6]
    $region13: #{tpu_custom_call.1} parent=1 // pred_fallthru
      _
    // Predicated region
    $region14: #{tpu_custom_call.1} parent=1 // pred_check
      _
    $region15: #{tpu_custom_call.1} parent=1 // pred_check_branch
      %47 = sbr.rel (0) target = $region17
    $region16: #{tpu_custom_call.1} parent=1 // pred_region
      _
    $region17: #{tpu_custom_call.1} parent=1 // pred_fallthru
      _
    // Predicated region
    $region18: #{tpu_custom_call.1} parent=1 // pred_check
      _
    $region19: #{tpu_custom_call.1} parent=1 // pred_check_branch
      %49 = sbr.rel (0) target = $region21
    $region20: #{tpu_custom_call.1} parent=1 // pred_region
      %s51 = ssub.s32 256, 256
      %52 = vsyncadd [#allocation9], %s51
      %s53 = sshll.u32 [#allocation8], 4
      %s54 = int_to_ptr.vmem [resolvable:$true] %s53
      %59 = dma.hbm_to_vmem [thread:$0]  %s4, 256, %s54, [#allocation9], 64, 64, 4
    $region21: #{tpu_custom_call.1} parent=1 // pred_fallthru
      _
    // Predicated region
    $region22: #{tpu_custom_call.1} parent=1 // pred_check
      _
    $region23: #{tpu_custom_call.1} parent=1 // pred_check_branch
      %61 = sbr.rel (0) target = $region25
    $region24: #{tpu_custom_call.1} parent=1 // pred_region
      %62 = dma.done [#allocation3], 64
    $region25: #{tpu_custom_call.1} parent=1 // pred_fallthru
      _
    // Predicated region
    $region26: #{tpu_custom_call.1} parent=1 // pred_check
      _
    $region27: #{tpu_custom_call.1} parent=1 // pred_check_branch
      %64 = sbr.rel (0) target = $region29
    $region28: #{tpu_custom_call.1} parent=1 // pred_region
      %65 = dma.done [#allocation6], 256
    $region29: #{tpu_custom_call.1} parent=1 // pred_fallthru
      _
    // Predicated region
    $region30: #{tpu_custom_call.1} parent=1 // pred_check
      _
    $region31: #{tpu_custom_call.1} parent=1 // pred_check_branch
      %67 = sbr.rel (0) target = $region33
    $region32: #{tpu_custom_call.1} parent=1 // pred_region
      %68 = dma.done [#allocation6], 64
    $region33: #{tpu_custom_call.1} parent=1 // pred_fallthru
      _
    // Predicated region
    $region34: #{tpu_custom_call.1} parent=1 // pred_check
      _
    $region35: #{tpu_custom_call.1} parent=1 // pred_check_branch
      %70 = sbr.rel (0) target = $region37
    $region36: #{tpu_custom_call.1} parent=1 // pred_region
      %71 = dma.done [#allocation9], 256
    $region37: #{tpu_custom_call.1} parent=1 // pred_fallthru
      _
    %v73 = vld [vmem:[#allocation2] sm:$0xf]
    %v74 = vld [vmem:[#allocation5] sm:$0xf]
    %v75 = vld [vmem:[#allocation5 + $0x4] sm:$0xf]
    %v76 = vld [vmem:[#allocation5 + $0x8] sm:$0xf]
    %v77 = vld [vmem:[#allocation5 + $0xc] sm:$0xf]
    %v82 = vunpack.c.l.b16 %v74
    %v83 = vunpack.c.l.b16 %v75
    %v84 = vunpack.c.l.b16 %v76
    %v85 = vunpack.c.l.b16 %v77
    %v86 = vpack.c.b16 %v83, %v82
    %v87 = vpack.c.b16 %v85, %v84
    %vm90 = vcmask 261120
    %v92 = vsel %vm90, %v73, 0
    %94 = vmatprep.subr.bf16.mxu0 0
    %95 = vmatpush1.bf16.msra.mxu0 0
    %96 = vmatprep.subr.bf16.mxu0 0
    %97 = vmatpush1.bf16.msra.mxu0 0
    %98 = vmatprep.subr.bf16.mxu0 0
    %99 = vmatpush1.bf16.msra.mxu0 0
    %100 = vmatprep.subr.bf16.mxu0 0
    %101 = vmatpush1.bf16.msra.mxu0 0
    %102 = vmatprep.subr.bf16.mxu0 0
    %103 = vmatpush1.bf16.msra.mxu0 0
    %104 = vmatprep.subr.bf16.mxu0 0
    %105 = vmatpush1.bf16.msra.mxu0 0
    %106 = vmatprep.subr.bf16.mxu0 0
    %107 = vmatpush1.bf16.msra.mxu0 %v87
    %108 = vmatprep.subr.bf16.mxu0 0
    %109 = vmatpush1.bf16.msra.mxu0 %v86
    %110 = vmatprep.subr.bf16.mxu0 0
    %111 = vmatpush2.bf16.msra.mxu0 0
    %112 = vmatprep.subr.bf16.mxu0 0
    %113 = vmatpush2.bf16.msra.mxu0 0
    %114 = vmatprep.subr.bf16.mxu0 0
    %115 = vmatpush2.bf16.msra.mxu0 0
    %116 = vmatprep.subr.bf16.mxu0 0
    %117 = vmatpush2.bf16.msra.mxu0 0
    %118 = vmatprep.subr.bf16.mxu0 0
    %119 = vmatpush2.bf16.msra.mxu0 0
    %120 = vmatprep.subr.bf16.mxu0 0
    %121 = vmatpush2.bf16.msra.mxu0 0
    %122 = vmatprep.subr.bf16.mxu0 0
    %123 = vmatpush2.bf16.msra.mxu0 0
    %124 = vmatprep.subr.bf16.mxu0 0
    %125 = vmatpush2.bf16.msra.mxu0 0
    %126 = vmatprep.mubr.bf16.mxu0 0
    %127 = vmatmul.mubr.bf16.gmra.mxu0 %v92
    %v128 = vpop.f32.mrf.mxu0
    %v129 = vadd.f32 0.0, %v128
    %v130 = vpop.f32.mrf.mxu0
    %v131 = vpop.f32.mrf.mxu0
    %v132 = vpop.f32.mrf.mxu0
    %133 = vdwg.mxu0
    %v134 = vpack.c.bf16 %v129, %v129
    %v135 = vld [vmem:[#allocation7] sm:$0xf]
    %v136 = vld [vmem:[%s3] sm:$0xf]
    %v137 = vld [vmem:[#allocation8] sm:$0xf]
    %v138 = vld [vmem:[#allocation8 + $0x4] sm:$0xf]
    %v139 = vld [vmem:[#allocation8 + $0x8] sm:$0xf]
    %v140 = vld [vmem:[#allocation8 + $0xc] sm:$0xf]
    %vm141 = vcmask 64512
    %v143 = vsel %vm141, %v134, 0
    %v146 = vsel %vm141, %v135, 0
    %148 = vmatprep.subr.bf16.mxu0 0
    %149 = vmatpush1.bf16.xpose.msra.mxu0 0
    %150 = vmatprep.subr.bf16.mxu0 0
    %151 = vmatpush1.bf16.xpose.msra.mxu0 0
    %152 = vmatprep.subr.bf16.mxu0 0
    %153 = vmatpush1.bf16.xpose.msra.mxu0 0
    %154 = vmatprep.subr.bf16.mxu0 0
    %155 = vmatpush1.bf16.xpose.msra.mxu0 0
    %156 = vmatprep.subr.bf16.mxu0 0
    %157 = vmatpush1.bf16.xpose.msra.mxu0 0
    %158 = vmatprep.subr.bf16.mxu0 0
    %159 = vmatpush1.bf16.xpose.msra.mxu0 0
    %160 = vmatprep.subr.bf16.mxu0 0
    %161 = vmatpush1.bf16.xpose.msra.mxu0 0
    %162 = vmatprep.subr.bf16.mxu0 0
    %163 = vmatpush1.bf16.xpose.msra.mxu0 %v146
    %164 = vmatprep.subr.bf16.mxu0 0
    %165 = vmatpush2.bf16.xpose.msra.mxu0 0
    %166 = vmatprep.subr.bf16.mxu0 0
    %167 = vmatpush2.bf16.xpose.msra.mxu0 0
    %168 = vmatprep.subr.bf16.mxu0 0
    %169 = vmatpush2.bf16.xpose.msra.mxu0 0
    %170 = vmatprep.subr.bf16.mxu0 0
    %171 = vmatpush2.bf16.xpose.msra.mxu0 0
    %172 = vmatprep.subr.bf16.mxu0 0
    %173 = vmatpush2.bf16.xpose.msra.mxu0 0
    %174 = vmatprep.subr.bf16.mxu0 0
    %175 = vmatpush2.bf16.xpose.msra.mxu0 0
    %176 = vmatprep.subr.bf16.mxu0 0
    %177 = vmatpush2.bf16.xpose.msra.mxu0 0
    %178 = vmatprep.subr.bf16.mxu0 0
    %179 = vmatpush2.bf16.xpose.msra.mxu0 0
    %180 = vmatprep.mubr.bf16.mxu0 0
    %181 = vmatmul.mubr.bf16.gmra.mxu0 %v143
    %v182 = vpop.f32.mrf.mxu0
    %v183 = vadd.f32 0.0, %v182
    %v184 = vpop.f32.mrf.mxu0
    %v185 = vpop.f32.mrf.mxu0
    %v186 = vpop.f32.mrf.mxu0
    %187 = vdwg.mxu0
    %v188 = vsel %vm141, %v183, -inf
    %189 = vmax.xlane.f32.xlu0 %v188
    %v190 = vpop.xlane.xlu0 %189
    %v191 = vsub.f32 %v183, %v190
    %v192 = vmul.f32 %v191, 1.442695
    %v193 = vpow.pop %v192
    %v194 = vsel %vm141, %v193, 0.0
    %195 = vadd.xlane.f32.xlu0 %v194
    %v196 = vpop.xlane.xlu0 %195
    %v197 = vrcp.pop %v196
    %v198 = vmul.f32 %v193, %v197
    %v199 = vpack.c.bf16 %v198, %v198
    %v201 = vsel %vm141, %v199, 0
    %vm203 = vcmask 1043456
    %v205 = vsel %vm203, %v136, 0
    %207 = vmatprep.subr.bf16.mxu0 0
    %208 = vmatpush1.bf16.msra.mxu0 0
    %209 = vmatprep.subr.bf16.mxu0 0
    %210 = vmatpush1.bf16.msra.mxu0 0
    %211 = vmatprep.subr.bf16.mxu0 0
    %212 = vmatpush1.bf16.msra.mxu0 0
    %213 = vmatprep.subr.bf16.mxu0 0
    %214 = vmatpush1.bf16.msra.mxu0 0
    %215 = vmatprep.subr.bf16.mxu0 0
    %216 = vmatpush1.bf16.msra.mxu0 0
    %217 = vmatprep.subr.bf16.mxu0 0
    %218 = vmatpush1.bf16.msra.mxu0 0
    %219 = vmatprep.subr.bf16.mxu0 0
    %220 = vmatpush1.bf16.msra.mxu0 0
    %221 = vmatprep.subr.bf16.mxu0 0
    %222 = vmatpush1.bf16.msra.mxu0 %v205
    %223 = vmatprep.subr.bf16.mxu0 0
    %224 = vmatpush2.bf16.msra.mxu0 0
    %225 = vmatprep.subr.bf16.mxu0 0
    %226 = vmatpush2.bf16.msra.mxu0 0
    %227 = vmatprep.subr.bf16.mxu0 0
    %228 = vmatpush2.bf16.msra.mxu0 0
    %229 = vmatprep.subr.bf16.mxu0 0
    %230 = vmatpush2.bf16.msra.mxu0 0
    %231 = vmatprep.subr.bf16.mxu0 0
    %232 = vmatpush2.bf16.msra.mxu0 0
    %233 = vmatprep.subr.bf16.mxu0 0
    %234 = vmatpush2.bf16.msra.mxu0 0
    %235 = vmatprep.subr.bf16.mxu0 0
    %236 = vmatpush2.bf16.msra.mxu0 0
    %237 = vmatprep.subr.bf16.mxu0 0
    %238 = vmatpush2.bf16.msra.mxu0 0
    %239 = vmatprep.mubr.bf16.mxu0 0
    %240 = vmatmul.mubr.bf16.gmra.mxu0 %v201
    %v241 = vpop.f32.mrf.mxu0
    %v242 = vadd.f32 0.0, %v241
    %v243 = vpop.f32.mrf.mxu0
    %v244 = vpop.f32.mrf.mxu0
    %v245 = vpop.f32.mrf.mxu0
    %246 = vdwg.mxu0
    %v247 = vpack.c.bf16 %v242, %v242
    %249 = vrot.lane.b32.xlu0 %v134, 120
    %v250 = vpop.permute.xlu0 %249
    %v252 = vunpack.c.l.b16 %v135
    %v253 = vpack.c.b16 %v252, %v252
    %254 = vrot.lane.b32.xlu0 %v253, 120
    %v255 = vpop.permute.xlu0 %254
    %v257 = vsel %vm141, %v250, 0
    %v260 = vsel %vm141, %v255, 0
    %262 = vmatprep.subr.bf16.mxu0 0
    %263 = vmatpush1.bf16.xpose.msra.mxu0 0
    %264 = vmatprep.subr.bf16.mxu0 0
    %265 = vmatpush1.bf16.xpose.msra.mxu0 0
    %266 = vmatprep.subr.bf16.mxu0 0
    %267 = vmatpush1.bf16.xpose.msra.mxu0 0
    %268 = vmatprep.subr.bf16.mxu0 0
    %269 = vmatpush1.bf16.xpose.msra.mxu0 0
    %270 = vmatprep.subr.bf16.mxu0 0
    %271 = vmatpush1.bf16.xpose.msra.mxu0 0
    %272 = vmatprep.subr.bf16.mxu0 0
    %273 = vmatpush1.bf16.xpose.msra.mxu0 0
    %274 = vmatprep.subr.bf16.mxu0 0
    %275 = vmatpush1.bf16.xpose.msra.mxu0 0
    %276 = vmatprep.subr.bf16.mxu0 0
    %277 = vmatpush1.bf16.xpose.msra.mxu0 %v260
    %278 = vmatprep.subr.bf16.mxu0 0
    %279 = vmatpush2.bf16.xpose.msra.mxu0 0
    %280 = vmatprep.subr.bf16.mxu0 0
    %281 = vmatpush2.bf16.xpose.msra.mxu0 0
    %282 = vmatprep.subr.bf16.mxu0 0
    %283 = vmatpush2.bf16.xpose.msra.mxu0 0
    %284 = vmatprep.subr.bf16.mxu0 0
    %285 = vmatpush2.bf16.xpose.msra.mxu0 0
    %286 = vmatprep.subr.bf16.mxu0 0
    %287 = vmatpush2.bf16.xpose.msra.mxu0 0
    %288 = vmatprep.subr.bf16.mxu0 0
    %289 = vmatpush2.bf16.xpose.msra.mxu0 0
    %290 = vmatprep.subr.bf16.mxu0 0
    %291 = vmatpush2.bf16.xpose.msra.mxu0 0
    %292 = vmatprep.subr.bf16.mxu0 0
    %293 = vmatpush2.bf16.xpose.msra.mxu0 0
    %294 = vmatprep.mubr.bf16.mxu0 0
    %295 = vmatmul.mubr.bf16.gmra.mxu0 %v257
    %v296 = vpop.f32.mrf.mxu0
    %v297 = vadd.f32 0.0, %v296
    %v298 = vpop.f32.mrf.mxu0
    %v299 = vpop.f32.mrf.mxu0
    %v300 = vpop.f32.mrf.mxu0
    %301 = vdwg.mxu0
    %v302 = vsel %vm141, %v297, -inf
    %303 = vmax.xlane.f32.xlu0 %v302
    %v304 = vpop.xlane.xlu0 %303
    %v305 = vsub.f32 %v297, %v304
    %v306 = vmul.f32 %v305, 1.442695
    %v307 = vpow.pop %v306
    %v308 = vsel %vm141, %v307, 0.0
    %309 = vadd.xlane.f32.xlu0 %v308
    %v310 = vpop.xlane.xlu0 %309
    %v311 = vrcp.pop %v310
    %v312 = vmul.f32 %v307, %v311
    %v313 = vpack.c.bf16 %v312, %v312
    %v315 = vunpack.c.l.b16 %v136
    %v316 = vpack.c.b16 %v315, %v315
    %317 = vrot.lane.b32.xlu0 %v316, 120
    %v318 = vpop.permute.xlu0 %317
    %v320 = vsel %vm141, %v313, 0
    %v323 = vsel %vm203, %v318, 0
    %325 = vmatprep.subr.bf16.mxu0 0
    %326 = vmatpush1.bf16.msra.mxu0 0
    %327 = vmatprep.subr.bf16.mxu0 0
    %328 = vmatpush1.bf16.msra.mxu0 0
    %329 = vmatprep.subr.bf16.mxu0 0
    %330 = vmatpush1.bf16.msra.mxu0 0
    %331 = vmatprep.subr.bf16.mxu0 0
    %332 = vmatpush1.bf16.msra.mxu0 0
    %333 = vmatprep.subr.bf16.mxu0 0
    %334 = vmatpush1.bf16.msra.mxu0 0
    %335 = vmatprep.subr.bf16.mxu0 0
    %336 = vmatpush1.bf16.msra.mxu0 0
    %337 = vmatprep.subr.bf16.mxu0 0
    %338 = vmatpush1.bf16.msra.mxu0 0
    %339 = vmatprep.subr.bf16.mxu0 0
    %340 = vmatpush1.bf16.msra.mxu0 %v323
    %341 = vmatprep.subr.bf16.mxu0 0
    %342 = vmatpush2.bf16.msra.mxu0 0
    %343 = vmatprep.subr.bf16.mxu0 0
    %344 = vmatpush2.bf16.msra.mxu0 0
    %345 = vmatprep.subr.bf16.mxu0 0
    %346 = vmatpush2.bf16.msra.mxu0 0
    %347 = vmatprep.subr.bf16.mxu0 0
    %348 = vmatpush2.bf16.msra.mxu0 0
    %349 = vmatprep.subr.bf16.mxu0 0
    %350 = vmatpush2.bf16.msra.mxu0 0
    %351 = vmatprep.subr.bf16.mxu0 0
    %352 = vmatpush2.bf16.msra.mxu0 0
    %353 = vmatprep.subr.bf16.mxu0 0
    %354 = vmatpush2.bf16.msra.mxu0 0
    %355 = vmatprep.subr.bf16.mxu0 0
    %356 = vmatpush2.bf16.msra.mxu0 0
    %357 = vmatprep.mubr.bf16.mxu0 0
    %358 = vmatmul.mubr.bf16.gmra.mxu0 %v320
    %v359 = vpop.f32.mrf.mxu0
    %v360 = vadd.f32 0.0, %v359
    %v361 = vpop.f32.mrf.mxu0
    %v362 = vpop.f32.mrf.mxu0
    %v363 = vpop.f32.mrf.mxu0
    %364 = vdwg.mxu0
    %v365 = vpack.c.bf16 %v360, %v360
    %v367 = vsel %vm141, %v365, 0
    %v370 = vsel %vm203, %v138, 0
    %372 = vmatprep.subr.bf16.mxu0 0
    %373 = vmatpush1.bf16.msra.mxu0 0
    %374 = vmatprep.subr.bf16.mxu0 0
    %375 = vmatpush1.bf16.msra.mxu0 0
    %376 = vmatprep.subr.bf16.mxu0 0
    %377 = vmatpush1.bf16.msra.mxu0 0
    %378 = vmatprep.subr.bf16.mxu0 0
    %379 = vmatpush1.bf16.msra.mxu0 0
    %380 = vmatprep.subr.bf16.mxu0 0
    %381 = vmatpush1.bf16.msra.mxu0 0
    %382 = vmatprep.subr.bf16.mxu0 0
    %383 = vmatpush1.bf16.msra.mxu0 0
    %384 = vmatprep.subr.bf16.mxu0 0
    %385 = vmatpush1.bf16.msra.mxu0 0
    %386 = vmatprep.subr.bf16.mxu0 0
    %387 = vmatpush1.bf16.msra.mxu0 %v370
    %388 = vmatprep.subr.bf16.mxu0 0
    %389 = vmatpush2.bf16.msra.mxu0 0
    %390 = vmatprep.subr.bf16.mxu0 0
    %391 = vmatpush2.bf16.msra.mxu0 0
    %392 = vmatprep.subr.bf16.mxu0 0
    %393 = vmatpush2.bf16.msra.mxu0 0
    %394 = vmatprep.subr.bf16.mxu0 0
    %395 = vmatpush2.bf16.msra.mxu0 0
    %396 = vmatprep.subr.bf16.mxu0 0
    %397 = vmatpush2.bf16.msra.mxu0 0
    %398 = vmatprep.subr.bf16.mxu0 0
    %399 = vmatpush2.bf16.msra.mxu0 0
    %400 = vmatprep.subr.bf16.mxu0 0
    %401 = vmatpush2.bf16.msra.mxu0 0
    %402 = vmatprep.subr.bf16.mxu0 0
    %403 = vmatpush2.bf16.msra.mxu0 0
    %404 = vmatprep.mubr.bf16.mxu0 0
    %405 = vmatmul.mubr.bf16.gmra.mxu0 %v367
    %v406 = vpop.f32.mrf.mxu0
    %v407 = vadd.f32 0.0, %v406
    %v408 = vpop.f32.mrf.mxu0
    %v409 = vpop.f32.mrf.mxu0
    %v410 = vpop.f32.mrf.mxu0
    %411 = vdwg.mxu0
    %v413 = vsel %vm141, %v247, 0
    %v416 = vsel %vm203, %v137, 0
    %418 = vmatprep.subr.bf16.mxu0 0
    %419 = vmatpush1.bf16.msra.mxu0 0
    %420 = vmatprep.subr.bf16.mxu0 0
    %421 = vmatpush1.bf16.msra.mxu0 0
    %422 = vmatprep.subr.bf16.mxu0 0
    %423 = vmatpush1.bf16.msra.mxu0 0
    %424 = vmatprep.subr.bf16.mxu0 0
    %425 = vmatpush1.bf16.msra.mxu0 0
    %426 = vmatprep.subr.bf16.mxu0 0
    %427 = vmatpush1.bf16.msra.mxu0 0
    %428 = vmatprep.subr.bf16.mxu0 0
    %429 = vmatpush1.bf16.msra.mxu0 0
    %430 = vmatprep.subr.bf16.mxu0 0
    %431 = vmatpush1.bf16.msra.mxu0 0
    %432 = vmatprep.subr.bf16.mxu0 0
    %433 = vmatpush1.bf16.msra.mxu0 %v416
    %434 = vmatprep.subr.bf16.mxu0 0
    %435 = vmatpush2.bf16.msra.mxu0 0
    %436 = vmatprep.subr.bf16.mxu0 0
    %437 = vmatpush2.bf16.msra.mxu0 0
    %438 = vmatprep.subr.bf16.mxu0 0
    %439 = vmatpush2.bf16.msra.mxu0 0
    %440 = vmatprep.subr.bf16.mxu0 0
    %441 = vmatpush2.bf16.msra.mxu0 0
    %442 = vmatprep.subr.bf16.mxu0 0
    %443 = vmatpush2.bf16.msra.mxu0 0
    %444 = vmatprep.subr.bf16.mxu0 0
    %445 = vmatpush2.bf16.msra.mxu0 0
    %446 = vmatprep.subr.bf16.mxu0 0
    %447 = vmatpush2.bf16.msra.mxu0 0
    %448 = vmatprep.subr.bf16.mxu0 0
    %449 = vmatpush2.bf16.msra.mxu0 0
    %450 = vmatprep.mubr.bf16.mxu0 0
    %451 = vmatmul.mubr.bf16.gmra.mxu0 %v413
    %v452 = vpop.f32.mrf.mxu0
    %v453 = vadd.f32 %v407, %v452
    %v454 = vpop.f32.mrf.mxu0
    %v455 = vpop.f32.mrf.mxu0
    %v456 = vpop.f32.mrf.mxu0
    %457 = vdwg.mxu0
    %458 = vrot.lane.b32.xlu0 %v134, 112
    %v459 = vpop.permute.xlu0 %458
    %460 = vrot.lane.b32.xlu0 %v253, 112
    %v461 = vpop.permute.xlu0 %460
    %v463 = vsel %vm141, %v459, 0
    %v466 = vsel %vm141, %v461, 0
    %468 = vmatprep.subr.bf16.mxu0 0
    %469 = vmatpush1.bf16.xpose.msra.mxu0 0
    %470 = vmatprep.subr.bf16.mxu0 0
    %471 = vmatpush1.bf16.xpose.msra.mxu0 0
    %472 = vmatprep.subr.bf16.mxu0 0
    %473 = vmatpush1.bf16.xpose.msra.mxu0 0
    %474 = vmatprep.subr.bf16.mxu0 0
    %475 = vmatpush1.bf16.xpose.msra.mxu0 0
    %476 = vmatprep.subr.bf16.mxu0 0
    %477 = vmatpush1.bf16.xpose.msra.mxu0 0
    %478 = vmatprep.subr.bf16.mxu0 0
    %479 = vmatpush1.bf16.xpose.msra.mxu0 0
    %480 = vmatprep.subr.bf16.mxu0 0
    %481 = vmatpush1.bf16.xpose.msra.mxu0 0
    %482 = vmatprep.subr.bf16.mxu0 0
    %483 = vmatpush1.bf16.xpose.msra.mxu0 %v466
    %484 = vmatprep.subr.bf16.mxu0 0
    %485 = vmatpush2.bf16.xpose.msra.mxu0 0
    %486 = vmatprep.subr.bf16.mxu0 0
    %487 = vmatpush2.bf16.xpose.msra.mxu0 0
    %488 = vmatprep.subr.bf16.mxu0 0
    %489 = vmatpush2.bf16.xpose.msra.mxu0 0
    %490 = vmatprep.subr.bf16.mxu0 0
    %491 = vmatpush2.bf16.xpose.msra.mxu0 0
    %492 = vmatprep.subr.bf16.mxu0 0
    %493 = vmatpush2.bf16.xpose.msra.mxu0 0
    %494 = vmatprep.subr.bf16.mxu0 0
    %495 = vmatpush2.bf16.xpose.msra.mxu0 0
    %496 = vmatprep.subr.bf16.mxu0 0
    %497 = vmatpush2.bf16.xpose.msra.mxu0 0
    %498 = vmatprep.subr.bf16.mxu0 0
    %499 = vmatpush2.bf16.xpose.msra.mxu0 0
    %500 = vmatprep.mubr.bf16.mxu0 0
    %501 = vmatmul.mubr.bf16.gmra.mxu0 %v463
    %v502 = vpop.f32.mrf.mxu0
    %v503 = vadd.f32 0.0, %v502
    %v504 = vpop.f32.mrf.mxu0
    %v505 = vpop.f32.mrf.mxu0
    %v506 = vpop.f32.mrf.mxu0
    %507 = vdwg.mxu0
    %v508 = vsel %vm141, %v503, -inf
    %509 = vmax.xlane.f32.xlu0 %v508
    %v510 = vpop.xlane.xlu0 %509
    %v511 = vsub.f32 %v503, %v510
    %v512 = vmul.f32 %v511, 1.442695
    %v513 = vpow.pop %v512
    %v514 = vsel %vm141, %v513, 0.0
    %515 = vadd.xlane.f32.xlu0 %v514
    %v516 = vpop.xlane.xlu0 %515
    %v517 = vrcp.pop %v516
    %v518 = vmul.f32 %v513, %v517
    %v519 = vpack.c.bf16 %v518, %v518
    %520 = vrot.lane.b32.xlu0 %v316, 112
    %v521 = vpop.permute.xlu0 %520
    %v523 = vsel %vm141, %v519, 0
    %v526 = vsel %vm203, %v521, 0
    %528 = vmatprep.subr.bf16.mxu0 0
    %529 = vmatpush1.bf16.msra.mxu0 0
    %530 = vmatprep.subr.bf16.mxu0 0
    %531 = vmatpush1.bf16.msra.mxu0 0
    %532 = vmatprep.subr.bf16.mxu0 0
    %533 = vmatpush1.bf16.msra.mxu0 0
    %534 = vmatprep.subr.bf16.mxu0 0
    %535 = vmatpush1.bf16.msra.mxu0 0
    %536 = vmatprep.subr.bf16.mxu0 0
    %537 = vmatpush1.bf16.msra.mxu0 0
    %538 = vmatprep.subr.bf16.mxu0 0
    %539 = vmatpush1.bf16.msra.mxu0 0
    %540 = vmatprep.subr.bf16.mxu0 0
    %541 = vmatpush1.bf16.msra.mxu0 0
    %542 = vmatprep.subr.bf16.mxu0 0
    %543 = vmatpush1.bf16.msra.mxu0 %v526
    %544 = vmatprep.subr.bf16.mxu0 0
    %545 = vmatpush2.bf16.msra.mxu0 0
    %546 = vmatprep.subr.bf16.mxu0 0
    %547 = vmatpush2.bf16.msra.mxu0 0
    %548 = vmatprep.subr.bf16.mxu0 0
    %549 = vmatpush2.bf16.msra.mxu0 0
    %550 = vmatprep.subr.bf16.mxu0 0
    %551 = vmatpush2.bf16.msra.mxu0 0
    %552 = vmatprep.subr.bf16.mxu0 0
    %553 = vmatpush2.bf16.msra.mxu0 0
    %554 = vmatprep.subr.bf16.mxu0 0
    %555 = vmatpush2.bf16.msra.mxu0 0
    %556 = vmatprep.subr.bf16.mxu0 0
    %557 = vmatpush2.bf16.msra.mxu0 0
    %558 = vmatprep.subr.bf16.mxu0 0
    %559 = vmatpush2.bf16.msra.mxu0 0
    %560 = vmatprep.mubr.bf16.mxu0 0
    %561 = vmatmul.mubr.bf16.gmra.mxu0 %v523
    %v562 = vpop.f32.mrf.mxu0
    %v563 = vadd.f32 0.0, %v562
    %v564 = vpop.f32.mrf.mxu0
    %v565 = vpop.f32.mrf.mxu0
    %v566 = vpop.f32.mrf.mxu0
    %567 = vdwg.mxu0
    %v568 = vpack.c.bf16 %v563, %v563
    %v570 = vsel %vm141, %v568, 0
    %v573 = vsel %vm203, %v139, 0
    %575 = vmatprep.subr.bf16.mxu0 0
    %576 = vmatpush1.bf16.msra.mxu0 0
    %577 = vmatprep.subr.bf16.mxu0 0
    %578 = vmatpush1.bf16.msra.mxu0 0
    %579 = vmatprep.subr.bf16.mxu0 0
    %580 = vmatpush1.bf16.msra.mxu0 0
    %581 = vmatprep.subr.bf16.mxu0 0
    %582 = vmatpush1.bf16.msra.mxu0 0
    %583 = vmatprep.subr.bf16.mxu0 0
    %584 = vmatpush1.bf16.msra.mxu0 0
    %585 = vmatprep.subr.bf16.mxu0 0
    %586 = vmatpush1.bf16.msra.mxu0 0
    %587 = vmatprep.subr.bf16.mxu0 0
    %588 = vmatpush1.bf16.msra.mxu0 0
    %589 = vmatprep.subr.bf16.mxu0 0
    %590 = vmatpush1.bf16.msra.mxu0 %v573
    %591 = vmatprep.subr.bf16.mxu0 0
    %592 = vmatpush2.bf16.msra.mxu0 0
    %593 = vmatprep.subr.bf16.mxu0 0
    %594 = vmatpush2.bf16.msra.mxu0 0
    %595 = vmatprep.subr.bf16.mxu0 0
    %596 = vmatpush2.bf16.msra.mxu0 0
    %597 = vmatprep.subr.bf16.mxu0 0
    %598 = vmatpush2.bf16.msra.mxu0 0
    %599 = vmatprep.subr.bf16.mxu0 0
    %600 = vmatpush2.bf16.msra.mxu0 0
    %601 = vmatprep.subr.bf16.mxu0 0
    %602 = vmatpush2.bf16.msra.mxu0 0
    %603 = vmatprep.subr.bf16.mxu0 0
    %604 = vmatpush2.bf16.msra.mxu0 0
    %605 = vmatprep.subr.bf16.mxu0 0
    %606 = vmatpush2.bf16.msra.mxu0 0
    %607 = vmatprep.mubr.bf16.mxu0 0
    %608 = vmatmul.mubr.bf16.gmra.mxu0 %v570
    %v609 = vpop.f32.mrf.mxu0
    %v610 = vadd.f32 0.0, %v609
    %v611 = vpop.f32.mrf.mxu0
    %v612 = vpop.f32.mrf.mxu0
    %v613 = vpop.f32.mrf.mxu0
    %614 = vdwg.mxu0
    %v615 = vadd.f32 %v453, %v610
    %616 = vrot.lane.b32.xlu0 %v134, 104
    %v617 = vpop.permute.xlu0 %616
    %618 = vrot.lane.b32.xlu0 %v253, 104
    %v619 = vpop.permute.xlu0 %618
    %v621 = vsel %vm141, %v617, 0
    %v624 = vsel %vm141, %v619, 0
    %626 = vmatprep.subr.bf16.mxu0 0
    %627 = vmatpush1.bf16.xpose.msra.mxu0 0
    %628 = vmatprep.subr.bf16.mxu0 0
    %629 = vmatpush1.bf16.xpose.msra.mxu0 0
    %630 = vmatprep.subr.bf16.mxu0 0
    %631 = vmatpush1.bf16.xpose.msra.mxu0 0
    %632 = vmatprep.subr.bf16.mxu0 0
    %633 = vmatpush1.bf16.xpose.msra.mxu0 0
    %634 = vmatprep.subr.bf16.mxu0 0
    %635 = vmatpush1.bf16.xpose.msra.mxu0 0
    %636 = vmatprep.subr.bf16.mxu0 0
    %637 = vmatpush1.bf16.xpose.msra.mxu0 0
    %638 = vmatprep.subr.bf16.mxu0 0
    %639 = vmatpush1.bf16.xpose.msra.mxu0 0
    %640 = vmatprep.subr.bf16.mxu0 0
    %641 = vmatpush1.bf16.xpose.msra.mxu0 %v624
    %642 = vmatprep.subr.bf16.mxu0 0
    %643 = vmatpush2.bf16.xpose.msra.mxu0 0
    %644 = vmatprep.subr.bf16.mxu0 0
    %645 = vmatpush2.bf16.xpose.msra.mxu0 0
    %646 = vmatprep.subr.bf16.mxu0 0
    %647 = vmatpush2.bf16.xpose.msra.mxu0 0
    %648 = vmatprep.subr.bf16.mxu0 0
    %649 = vmatpush2.bf16.xpose.msra.mxu0 0
    %650 = vmatprep.subr.bf16.mxu0 0
    %651 = vmatpush2.bf16.xpose.msra.mxu0 0
    %652 = vmatprep.subr.bf16.mxu0 0
    %653 = vmatpush2.bf16.xpose.msra.mxu0 0
    %654 = vmatprep.subr.bf16.mxu0 0
    %655 = vmatpush2.bf16.xpose.msra.mxu0 0
    %656 = vmatprep.subr.bf16.mxu0 0
    %657 = vmatpush2.bf16.xpose.msra.mxu0 0
    %658 = vmatprep.mubr.bf16.mxu0 0
    %659 = vmatmul.mubr.bf16.gmra.mxu0 %v621
    %v660 = vpop.f32.mrf.mxu0
    %v661 = vadd.f32 0.0, %v660
    %v662 = vpop.f32.mrf.mxu0
    %v663 = vpop.f32.mrf.mxu0
    %v664 = vpop.f32.mrf.mxu0
    %665 = vdwg.mxu0
    %v666 = vsel %vm141, %v661, -inf
    %667 = vmax.xlane.f32.xlu0 %v666
    %v668 = vpop.xlane.xlu0 %667
    %v669 = vsub.f32 %v661, %v668
    %v670 = vmul.f32 %v669, 1.442695
    %v671 = vpow.pop %v670
    %v672 = vsel %vm141, %v671, 0.0
    %673 = vadd.xlane.f32.xlu0 %v672
    %v674 = vpop.xlane.xlu0 %673
    %v675 = vrcp.pop %v674
    %v676 = vmul.f32 %v671, %v675
    %v677 = vpack.c.bf16 %v676, %v676
    %678 = vrot.lane.b32.xlu0 %v316, 104
    %v679 = vpop.permute.xlu0 %678
    %v681 = vsel %vm141, %v677, 0
    %v684 = vsel %vm203, %v679, 0
    %686 = vmatprep.subr.bf16.mxu0 0
    %687 = vmatpush1.bf16.msra.mxu0 0
    %688 = vmatprep.subr.bf16.mxu0 0
    %689 = vmatpush1.bf16.msra.mxu0 0
    %690 = vmatprep.subr.bf16.mxu0 0
    %691 = vmatpush1.bf16.msra.mxu0 0
    %692 = vmatprep.subr.bf16.mxu0 0
    %693 = vmatpush1.bf16.msra.mxu0 0
    %694 = vmatprep.subr.bf16.mxu0 0
    %695 = vmatpush1.bf16.msra.mxu0 0
    %696 = vmatprep.subr.bf16.mxu0 0
    %697 = vmatpush1.bf16.msra.mxu0 0
    %698 = vmatprep.subr.bf16.mxu0 0
    %699 = vmatpush1.bf16.msra.mxu0 0
    %700 = vmatprep.subr.bf16.mxu0 0
    %701 = vmatpush1.bf16.msra.mxu0 %v684
    %702 = vmatprep.subr.bf16.mxu0 0
    %703 = vmatpush2.bf16.msra.mxu0 0
    %704 = vmatprep.subr.bf16.mxu0 0
    %705 = vmatpush2.bf16.msra.mxu0 0
    %706 = vmatprep.subr.bf16.mxu0 0
    %707 = vmatpush2.bf16.msra.mxu0 0
    %708 = vmatprep.subr.bf16.mxu0 0
    %709 = vmatpush2.bf16.msra.mxu0 0
    %710 = vmatprep.subr.bf16.mxu0 0
    %711 = vmatpush2.bf16.msra.mxu0 0
    %712 = vmatprep.subr.bf16.mxu0 0
    %713 = vmatpush2.bf16.msra.mxu0 0
    %714 = vmatprep.subr.bf16.mxu0 0
    %715 = vmatpush2.bf16.msra.mxu0 0
    %716 = vmatprep.subr.bf16.mxu0 0
    %717 = vmatpush2.bf16.msra.mxu0 0
    %718 = vmatprep.mubr.bf16.mxu0 0
    %719 = vmatmul.mubr.bf16.gmra.mxu0 %v681
    %v720 = vpop.f32.mrf.mxu0
    %v721 = vadd.f32 0.0, %v720
    %v722 = vpop.f32.mrf.mxu0
    %v723 = vpop.f32.mrf.mxu0
    %v724 = vpop.f32.mrf.mxu0
    %725 = vdwg.mxu0
    %v726 = vpack.c.bf16 %v721, %v721
    %v728 = vsel %vm141, %v726, 0
    %v731 = vsel %vm203, %v140, 0
    %733 = vmatprep.subr.bf16.mxu0 0
    %734 = vmatpush1.bf16.msra.mxu0 0
    %735 = vmatprep.subr.bf16.mxu0 0
    %736 = vmatpush1.bf16.msra.mxu0 0
    %737 = vmatprep.subr.bf16.mxu0 0
    %738 = vmatpush1.bf16.msra.mxu0 0
    %739 = vmatprep.subr.bf16.mxu0 0
    %740 = vmatpush1.bf16.msra.mxu0 0
    %741 = vmatprep.subr.bf16.mxu0 0
    %742 = vmatpush1.bf16.msra.mxu0 0
    %743 = vmatprep.subr.bf16.mxu0 0
    %744 = vmatpush1.bf16.msra.mxu0 0
    %745 = vmatprep.subr.bf16.mxu0 0
    %746 = vmatpush1.bf16.msra.mxu0 0
    %747 = vmatprep.subr.bf16.mxu0 0
    %748 = vmatpush1.bf16.msra.mxu0 %v731
    %749 = vmatprep.subr.bf16.mxu0 0
    %750 = vmatpush2.bf16.msra.mxu0 0
    %751 = vmatprep.subr.bf16.mxu0 0
    %752 = vmatpush2.bf16.msra.mxu0 0
    %753 = vmatprep.subr.bf16.mxu0 0
    %754 = vmatpush2.bf16.msra.mxu0 0
    %755 = vmatprep.subr.bf16.mxu0 0
    %756 = vmatpush2.bf16.msra.mxu0 0
    %757 = vmatprep.subr.bf16.mxu0 0
    %758 = vmatpush2.bf16.msra.mxu0 0
    %759 = vmatprep.subr.bf16.mxu0 0
    %760 = vmatpush2.bf16.msra.mxu0 0
    %761 = vmatprep.subr.bf16.mxu0 0
    %762 = vmatpush2.bf16.msra.mxu0 0
    %763 = vmatprep.subr.bf16.mxu0 0
    %764 = vmatpush2.bf16.msra.mxu0 0
    %765 = vmatprep.mubr.bf16.mxu0 0
    %766 = vmatmul.mubr.bf16.gmra.mxu0 %v728
    %v767 = vpop.f32.mrf.mxu0
    %v768 = vadd.f32 0.0, %v767
    %v769 = vpop.f32.mrf.mxu0
    %v770 = vpop.f32.mrf.mxu0
    %v771 = vpop.f32.mrf.mxu0
    %772 = vdwg.mxu0
    %v773 = vadd.f32 %v615, %v768
    %774 = vst.msk [vmem:[#allocation10] sm:$0xff] %vm90, %v773
    // Predicated region
    $region38: #{tpu_custom_call.1} parent=1 // pred_check
      _
    $region39: #{tpu_custom_call.1} parent=1 // pred_check_branch
      %776 = sbr.rel (0) target = $region41
    $region40: #{tpu_custom_call.1} parent=1 // pred_region
      %s778 = ssub.s32 128, 128
      %779 = vsyncadd [#allocation4], %s778
      %s781 = sshll.u32 [#allocation10], 4
      %s782 = int_to_ptr.vmem [resolvable:$true] %s781
      %784 = dma.vmem_to_hbm [thread:$0]  %s782, 128, %s5, [#allocation4]
    $region41: #{tpu_custom_call.1} parent=1 // pred_fallthru
      _
    // Predicated region
    $region42: #{tpu_custom_call.1} parent=1 // pred_check
      _
    $region43: #{tpu_custom_call.1} parent=1 // pred_check_branch
      %786 = sbr.rel (0) target = $region45
    $region44: #{tpu_custom_call.1} parent=1 // pred_region
      %787 = dma.done [#allocation4], 128
    $region45: #{tpu_custom_call.1} parent=1 // pred_fallthru
      _
    %788 = vsyncpa [#allocation3], 1
    %789 = vsyncpa [#allocation6], 1
    %790 = vsyncpa [#allocation9], 1
    %791 = vsyncpa [#allocation4], 1

// kernel: tpu_custom_call.1
$region0: #{tpu_custom_call.1}
  #allocation0 [shape = 'u32[]', space=smem, size = 0x4, offset = 0x4, fixed_abs, tag = 'smem constant byte address 0x4 - core index']
  #allocation1 [shape = 'u32[144,128]{1,0:T(1,128)}', space=vmem, size = 0x12000, scoped, tag = 'internal scratch']
  %s0 = inlined_call_operand.hbm [shape: bf16[8,32], index: 0, kind: input, shape index: {}]
  %s1 = inlined_call_operand.hbm [shape: bf16[32,32], index: 1, kind: input, shape index: {}]
  %s2 = inlined_call_operand.hbm [shape: bf16[8,32], index: 2, kind: input, shape index: {}]
  %s3 = inlined_call_operand.vmem [shape: bf16[8,32], index: 3, kind: input, shape index: {}]
  %s4 = inlined_call_operand.hbm [shape: bf16[32,32], index: 4, kind: input, shape index: {}]
  %s5 = inlined_call_operand.hbm [shape: f32[8,32], index: 5, kind: output, shape index: {}]
  %s6 = sld [smem:[#allocation0]]
  $region46: #{tpu_custom_call.1} parent=0
    _
  %s8 = ssub.s32 1, %s6
  %s9 = scalar_select 0, %s8, %s6
  $region1: #{tpu_custom_call.1} parent=0
    #allocation2 [shape = 'u8[2048]{0}', space=vmem, size = 0x800, scoped, tag = 'input window, operand 0, single buffered']
    #allocation3 [shape = 's32[1]{0}', space=sflag, size = 0x4, scoped, tag = 'scoped memory for tpu_custom_call.1']
    #allocation4 [shape = 's32[1]{0}', space=sflag, size = 0x4, scoped, tag = 'scoped memory for tpu_custom_call.1']
    #allocation5 [shape = 'u8[8192]{0}', space=vmem, size = 0x2000, scoped, tag = 'input window, operand 1, single buffered']
    #allocation6 [shape = 's32[1]{0}', space=sflag, size = 0x4, scoped, tag = 'scoped memory for tpu_custom_call.1']
    #allocation7 [shape = 'u8[2048]{0}', space=vmem, size = 0x800, scoped, tag = 'input window, operand 2, single buffered']
    #allocation8 [shape = 'u8[8192]{0}', space=vmem, size = 0x2000, scoped, tag = 'input window, operand 4, single buffered']
    #allocation9 [shape = 's32[1]{0}', space=sflag, size = 0x4, scoped, tag = 'scoped memory for tpu_custom_call.1']
    #allocation10 [shape = 'u8[4096]{0}', space=vmem, size = 0x1000, scoped, tag = 'output window, operand 0, single buffered']
    %10 = vsyncpa [#allocation3], 0
    %11 = vsyncpa [#allocation6], 0
    %12 = vsyncpa [#allocation9], 0
    %13 = vsyncpa [#allocation4], 0
    // Predicated region
    $region2: #{tpu_custom_call.1} parent=1 // pred_check
      _
    $region3: #{tpu_custom_call.1} parent=1 // pred_check_branch
      %15 = sbr.rel (0) target = $region5
    $region4: #{tpu_custom_call.1} parent=1 // pred_region
      %s17 = ssub.s32 64, 64
      %18 = vsyncadd [#allocation3], %s17
      %s20 = sshll.u32 [#allocation2], 4
      %s21 = int_to_ptr.vmem [resolvable:$true] %s20
      %23 = dma.hbm_to_vmem [thread:$0]  %s0, 64, %s21, [#allocation3]
    $region5: #{tpu_custom_call.1} parent=1 // pred_fallthru
      _
    // Predicated region
    $region6: #{tpu_custom_call.1} parent=1 // pred_check
      _
    $region7: #{tpu_custom_call.1} parent=1 // pred_check_branch
      %25 = sbr.rel (0) target = $region9
    $region8: #{tpu_custom_call.1} parent=1 // pred_region
      %s27 = ssub.s32 256, 256
      %28 = vsyncadd [#allocation6], %s27
      %s29 = sshll.u32 [#allocation5], 4
      %s30 = int_to_ptr.vmem [resolvable:$true] %s29
      %35 = dma.hbm_to_vmem [thread:$0]  %s1, 256, %s30, [#allocation6], 64, 64, 4
    $region9: #{tpu_custom_call.1} parent=1 // pred_fallthru
      _
    // Predicated region
    $region10: #{tpu_custom_call.1} parent=1 // pred_check
      _
    $region11: #{tpu_custom_call.1} parent=1 // pred_check_branch
      %37 = sbr.rel (0) target = $region13
    $region12: #{tpu_custom_call.1} parent=1 // pred_region
      %s39 = ssub.s32 64, 64
      %40 = vsyncadd [#allocation6], %s39
      %s42 = sshll.u32 [#allocation7], 4
      %s43 = int_to_ptr.vmem [resolvable:$true] %s42
      %45 = dma.hbm_to_vmem [thread:$0]  %s2, 64, %s43, [#allocation6]
    $region13: #{tpu_custom_call.1} parent=1 // pred_fallthru
      _
    // Predicated region
    $region14: #{tpu_custom_call.1} parent=1 // pred_check
      _
    $region15: #{tpu_custom_call.1} parent=1 // pred_check_branch
      %47 = sbr.rel (0) target = $region17
    $region16: #{tpu_custom_call.1} parent=1 // pred_region
      _
    $region17: #{tpu_custom_call.1} parent=1 // pred_fallthru
      _
    // Predicated region
    $region18: #{tpu_custom_call.1} parent=1 // pred_check
      _
    $region19: #{tpu_custom_call.1} parent=1 // pred_check_branch
      %49 = sbr.rel (0) target = $region21
    $region20: #{tpu_custom_call.1} parent=1 // pred_region
      %s51 = ssub.s32 256, 256
      %52 = vsyncadd [#allocation9], %s51
      %s53 = sshll.u32 [#allocation8], 4
      %s54 = int_to_ptr.vmem [resolvable:$true] %s53
      %59 = dma.hbm_to_vmem [thread:$0]  %s4, 256, %s54, [#allocation9], 64, 64, 4
    $region21: #{tpu_custom_call.1} parent=1 // pred_fallthru
      _
    // Predicated region
    $region22: #{tpu_custom_call.1} parent=1 // pred_check
      _
    $region23: #{tpu_custom_call.1} parent=1 // pred_check_branch
      %61 = sbr.rel (0) target = $region25
    $region24: #{tpu_custom_call.1} parent=1 // pred_region
      %62 = dma.done [#allocation3], 64
    $region25: #{tpu_custom_call.1} parent=1 // pred_fallthru
      _
    // Predicated region
    $region26: #{tpu_custom_call.1} parent=1 // pred_check
      _
    $region27: #{tpu_custom_call.1} parent=1 // pred_check_branch
      %64 = sbr.rel (0) target = $region29
    $region28: #{tpu_custom_call.1} parent=1 // pred_region
      %65 = dma.done [#allocation6], 256
    $region29: #{tpu_custom_call.1} parent=1 // pred_fallthru
      _
    // Predicated region
    $region30: #{tpu_custom_call.1} parent=1 // pred_check
      _
    $region31: #{tpu_custom_call.1} parent=1 // pred_check_branch
      %67 = sbr.rel (0) target = $region33
    $region32: #{tpu_custom_call.1} parent=1 // pred_region
      %68 = dma.done [#allocation6], 64
    $region33: #{tpu_custom_call.1} parent=1 // pred_fallthru
      _
    // Predicated region
    $region34: #{tpu_custom_call.1} parent=1 // pred_check
      _
    $region35: #{tpu_custom_call.1} parent=1 // pred_check_branch
      %70 = sbr.rel (0) target = $region37
    $region36: #{tpu_custom_call.1} parent=1 // pred_region
      %71 = dma.done [#allocation9], 256
    $region37: #{tpu_custom_call.1} parent=1 // pred_fallthru
      _
    %v73 = vld [vmem:[#allocation2] sm:$0xf]
    %v74 = vld [vmem:[#allocation5] sm:$0xf]
    %v75 = vld [vmem:[#allocation5 + $0x4] sm:$0xf]
    %v76 = vld [vmem:[#allocation5 + $0x8] sm:$0xf]
    %v77 = vld [vmem:[#allocation5 + $0xc] sm:$0xf]
    %v82 = vunpack.c.l.b16 %v74
    %v83 = vunpack.c.l.b16 %v75
    %v84 = vunpack.c.l.b16 %v76
    %v85 = vunpack.c.l.b16 %v77
    %v86 = vpack.c.b16 %v83, %v82
    %v87 = vpack.c.b16 %v85, %v84
    %vm90 = vcmask 261120
    %v92 = vsel %vm90, %v73, 0
    %94 = vmatprep.subr.bf16.mxu0 0
    %95 = vmatpush1.bf16.msra.mxu0 0
    %96 = vmatprep.subr.bf16.mxu0 0
    %97 = vmatpush1.bf16.msra.mxu0 0
    %98 = vmatprep.subr.bf16.mxu0 0
    %99 = vmatpush1.bf16.msra.mxu0 0
    %100 = vmatprep.subr.bf16.mxu0 0
    %101 = vmatpush1.bf16.msra.mxu0 0
    %102 = vmatprep.subr.bf16.mxu0 0
    %103 = vmatpush1.bf16.msra.mxu0 0
    %104 = vmatprep.subr.bf16.mxu0 0
    %105 = vmatpush1.bf16.msra.mxu0 0
    %106 = vmatprep.subr.bf16.mxu0 0
    %107 = vmatpush1.bf16.msra.mxu0 %v87
    %108 = vmatprep.subr.bf16.mxu0 0
    %109 = vmatpush1.bf16.msra.mxu0 %v86
    %110 = vmatprep.subr.bf16.mxu0 0
    %111 = vmatpush2.bf16.msra.mxu0 0
    %112 = vmatprep.subr.bf16.mxu0 0
    %113 = vmatpush2.bf16.msra.mxu0 0
    %114 = vmatprep.subr.bf16.mxu0 0
    %115 = vmatpush2.bf16.msra.mxu0 0
    %116 = vmatprep.subr.bf16.mxu0 0
    %117 = vmatpush2.bf16.msra.mxu0 0
    %118 = vmatprep.subr.bf16.mxu0 0
    %119 = vmatpush2.bf16.msra.mxu0 0
    %120 = vmatprep.subr.bf16.mxu0 0
    %121 = vmatpush2.bf16.msra.mxu0 0
    %122 = vmatprep.subr.bf16.mxu0 0
    %123 = vmatpush2.bf16.msra.mxu0 0
    %124 = vmatprep.subr.bf16.mxu0 0
    %125 = vmatpush2.bf16.msra.mxu0 0
    %126 = vmatprep.mubr.bf16.mxu0 0
    %127 = vmatmul.mubr.bf16.gmra.mxu0 %v92
    %v128 = vpop.f32.mrf.mxu0
    %v129 = vadd.f32 0.0, %v128
    %v130 = vpop.f32.mrf.mxu0
    %v131 = vpop.f32.mrf.mxu0
    %v132 = vpop.f32.mrf.mxu0
    %133 = vdwg.mxu0
    %v134 = vpack.c.bf16 %v129, %v129
    %v135 = vld [vmem:[#allocation7] sm:$0xf]
    %v136 = vld [vmem:[%s3] sm:$0xf]
    %v137 = vld [vmem:[#allocation8] sm:$0xf]
    %v138 = vld [vmem:[#allocation8 + $0x4] sm:$0xf]
    %v139 = vld [vmem:[#allocation8 + $0x8] sm:$0xf]
    %v140 = vld [vmem:[#allocation8 + $0xc] sm:$0xf]
    %vm141 = vcmask 64512
    %v143 = vsel %vm141, %v134, 0
    %v146 = vsel %vm141, %v135, 0
    %148 = vmatprep.subr.bf16.mxu0 0
    %149 = vmatpush1.bf16.xpose.msra.mxu0 0
    %150 = vmatprep.subr.bf16.mxu0 0
    %151 = vmatpush1.bf16.xpose.msra.mxu0 0
    %152 = vmatprep.subr.bf16.mxu0 0
    %153 = vmatpush1.bf16.xpose.msra.mxu0 0
    %154 = vmatprep.subr.bf16.mxu0 0
    %155 = vmatpush1.bf16.xpose.msra.mxu0 0
    %156 = vmatprep.subr.bf16.mxu0 0
    %157 = vmatpush1.bf16.xpose.msra.mxu0 0
    %158 = vmatprep.subr.bf16.mxu0 0
    %159 = vmatpush1.bf16.xpose.msra.mxu0 0
    %160 = vmatprep.subr.bf16.mxu0 0
    %161 = vmatpush1.bf16.xpose.msra.mxu0 0
    %162 = vmatprep.subr.bf16.mxu0 0
    %163 = vmatpush1.bf16.xpose.msra.mxu0 %v146
    %164 = vmatprep.subr.bf16.mxu0 0
    %165 = vmatpush2.bf16.xpose.msra.mxu0 0
    %166 = vmatprep.subr.bf16.mxu0 0
    %167 = vmatpush2.bf16.xpose.msra.mxu0 0
    %168 = vmatprep.subr.bf16.mxu0 0
    %169 = vmatpush2.bf16.xpose.msra.mxu0 0
    %170 = vmatprep.subr.bf16.mxu0 0
    %171 = vmatpush2.bf16.xpose.msra.mxu0 0
    %172 = vmatprep.subr.bf16.mxu0 0
    %173 = vmatpush2.bf16.xpose.msra.mxu0 0
    %174 = vmatprep.subr.bf16.mxu0 0
    %175 = vmatpush2.bf16.xpose.msra.mxu0 0
    %176 = vmatprep.subr.bf16.mxu0 0
    %177 = vmatpush2.bf16.xpose.msra.mxu0 0
    %178 = vmatprep.subr.bf16.mxu0 0
    %179 = vmatpush2.bf16.xpose.msra.mxu0 0
    %180 = vmatprep.mubr.bf16.mxu0 0
    %181 = vmatmul.mubr.bf16.gmra.mxu0 %v143
    %v182 = vpop.f32.mrf.mxu0
    %v183 = vadd.f32 0.0, %v182
    %v184 = vpop.f32.mrf.mxu0
    %v185 = vpop.f32.mrf.mxu0
    %v186 = vpop.f32.mrf.mxu0
    %187 = vdwg.mxu0
    %v188 = vsel %vm141, %v183, -inf
    %189 = vmax.xlane.f32.xlu0 %v188
    %v190 = vpop.xlane.xlu0 %189
    %v191 = vsub.f32 %v183, %v190
    %v192 = vmul.f32 %v191, 1.442695
    %v193 = vpow.pop %v192
    %v194 = vsel %vm141, %v193, 0.0
    %195 = vadd.xlane.f32.xlu0 %v194
    %v196 = vpop.xlane.xlu0 %195
    %v197 = vrcp.pop %v196
    %v198 = vmul.f32 %v193, %v197
    %v199 = vpack.c.bf16 %v198, %v198
    %v201 = vsel %vm141, %v199, 0
    %vm203 = vcmask 1043456
    %v205 = vsel %vm203, %v136, 0
    %207 = vmatprep.subr.bf16.mxu0 0
    %208 = vmatpush1.bf16.msra.mxu0 0
    %209 = vmatprep.subr.bf16.mxu0 0
    %210 = vmatpush1.bf16.msra.mxu0 0
    %211 = vmatprep.subr.bf16.mxu0 0
    %212 = vmatpush1.bf16.msra.mxu0 0
    %213 = vmatprep.subr.bf16.mxu0 0
    %214 = vmatpush1.bf16.msra.mxu0 0
    %215 = vmatprep.subr.bf16.mxu0 0
    %216 = vmatpush1.bf16.msra.mxu0 0
    %217 = vmatprep.subr.bf16.mxu0 0
    %218 = vmatpush1.bf16.msra.mxu0 0
    %219 = vmatprep.subr.bf16.mxu0 0
    %220 = vmatpush1.bf16.msra.mxu0 0
    %221 = vmatprep.subr.bf16.mxu0 0
    %222 = vmatpush1.bf16.msra.mxu0 %v205
    %223 = vmatprep.subr.bf16.mxu0 0
    %224 = vmatpush2.bf16.msra.mxu0 0
    %225 = vmatprep.subr.bf16.mxu0 0
    %226 = vmatpush2.bf16.msra.mxu0 0
    %227 = vmatprep.subr.bf16.mxu0 0
    %228 = vmatpush2.bf16.msra.mxu0 0
    %229 = vmatprep.subr.bf16.mxu0 0
    %230 = vmatpush2.bf16.msra.mxu0 0
    %231 = vmatprep.subr.bf16.mxu0 0
    %232 = vmatpush2.bf16.msra.mxu0 0
    %233 = vmatprep.subr.bf16.mxu0 0
    %234 = vmatpush2.bf16.msra.mxu0 0
    %235 = vmatprep.subr.bf16.mxu0 0
    %236 = vmatpush2.bf16.msra.mxu0 0
    %237 = vmatprep.subr.bf16.mxu0 0
    %238 = vmatpush2.bf16.msra.mxu0 0
    %239 = vmatprep.mubr.bf16.mxu0 0
    %240 = vmatmul.mubr.bf16.gmra.mxu0 %v201
    %v241 = vpop.f32.mrf.mxu0
    %v242 = vadd.f32 0.0, %v241
    %v243 = vpop.f32.mrf.mxu0
    %v244 = vpop.f32.mrf.mxu0
    %v245 = vpop.f32.mrf.mxu0
    %246 = vdwg.mxu0
    %v247 = vpack.c.bf16 %v242, %v242
    %249 = vrot.lane.b32.xlu0 %v134, 120
    %v250 = vpop.permute.xlu0 %249
    %v252 = vunpack.c.l.b16 %v135
    %v253 = vpack.c.b16 %v252, %v252
    %254 = vrot.lane.b32.xlu0 %v253, 120
    %v255 = vpop.permute.xlu0 %254
    %v257 = vsel %vm141, %v250, 0
    %v260 = vsel %vm141, %v255, 0
    %262 = vmatprep.subr.bf16.mxu0 0
    %263 = vmatpush1.bf16.xpose.msra.mxu0 0
    %264 = vmatprep.subr.bf16.mxu0 0
    %265 = vmatpush1.bf16.xpose.msra.mxu0 0
    %266 = vmatprep.subr.bf16.mxu0 0
    %267 = vmatpush1.bf16.xpose.msra.mxu0 0
    %268 = vmatprep.subr.bf16.mxu0 0
    %269 = vmatpush1.bf16.xpose.msra.mxu0 0
    %270 = vmatprep.subr.bf16.mxu0 0
    %271 = vmatpush1.bf16.xpose.msra.mxu0 0
    %272 = vmatprep.subr.bf16.mxu0 0
    %273 = vmatpush1.bf16.xpose.msra.mxu0 0
    %274 = vmatprep.subr.bf16.mxu0 0
    %275 = vmatpush1.bf16.xpose.msra.mxu0 0
    %276 = vmatprep.subr.bf16.mxu0 0
    %277 = vmatpush1.bf16.xpose.msra.mxu0 %v260
    %278 = vmatprep.subr.bf16.mxu0 0
    %279 = vmatpush2.bf16.xpose.msra.mxu0 0
    %280 = vmatprep.subr.bf16.mxu0 0
    %281 = vmatpush2.bf16.xpose.msra.mxu0 0
    %282 = vmatprep.subr.bf16.mxu0 0
    %283 = vmatpush2.bf16.xpose.msra.mxu0 0
    %284 = vmatprep.subr.bf16.mxu0 0
    %285 = vmatpush2.bf16.xpose.msra.mxu0 0
    %286 = vmatprep.subr.bf16.mxu0 0
    %287 = vmatpush2.bf16.xpose.msra.mxu0 0
    %288 = vmatprep.subr.bf16.mxu0 0
    %289 = vmatpush2.bf16.xpose.msra.mxu0 0
    %290 = vmatprep.subr.bf16.mxu0 0
    %291 = vmatpush2.bf16.xpose.msra.mxu0 0
    %292 = vmatprep.subr.bf16.mxu0 0
    %293 = vmatpush2.bf16.xpose.msra.mxu0 0
    %294 = vmatprep.mubr.bf16.mxu0 0
    %295 = vmatmul.mubr.bf16.gmra.mxu0 %v257
    %v296 = vpop.f32.mrf.mxu0
    %v297 = vadd.f32 0.0, %v296
    %v298 = vpop.f32.mrf.mxu0
    %v299 = vpop.f32.mrf.mxu0
    %v300 = vpop.f32.mrf.mxu0
    %301 = vdwg.mxu0
    %v302 = vsel %vm141, %v297, -inf
    %303 = vmax.xlane.f32.xlu0 %v302
    %v304 = vpop.xlane.xlu0 %303
    %v305 = vsub.f32 %v297, %v304
    %v306 = vmul.f32 %v305, 1.442695
    %v307 = vpow.pop %v306
    %v308 = vsel %vm141, %v307, 0.0
    %309 = vadd.xlane.f32.xlu0 %v308
    %v310 = vpop.xlane.xlu0 %309
    %v311 = vrcp.pop %v310
    %v312 = vmul.f32 %v307, %v311
    %v313 = vpack.c.bf16 %v312, %v312
    %v315 = vunpack.c.l.b16 %v136
    %v316 = vpack.c.b16 %v315, %v315
    %317 = vrot.lane.b32.xlu0 %v316, 120
    %v318 = vpop.permute.xlu0 %317
    %v320 = vsel %vm141, %v313, 0
    %v323 = vsel %vm203, %v318, 0
    %325 = vmatprep.subr.bf16.mxu0 0
    %326 = vmatpush1.bf16.msra.mxu0 0
    %327 = vmatprep.subr.bf16.mxu0 0
    %328 = vmatpush1.bf16.msra.mxu0 0
    %329 = vmatprep.subr.bf16.mxu0 0
    %330 = vmatpush1.bf16.msra.mxu0 0
    %331 = vmatprep.subr.bf16.mxu0 0
    %332 = vmatpush1.bf16.msra.mxu0 0
    %333 = vmatprep.subr.bf16.mxu0 0
    %334 = vmatpush1.bf16.msra.mxu0 0
    %335 = vmatprep.subr.bf16.mxu0 0
    %336 = vmatpush1.bf16.msra.mxu0 0
    %337 = vmatprep.subr.bf16.mxu0 0
    %338 = vmatpush1.bf16.msra.mxu0 0
    %339 = vmatprep.subr.bf16.mxu0 0
    %340 = vmatpush1.bf16.msra.mxu0 %v323
    %341 = vmatprep.subr.bf16.mxu0 0
    %342 = vmatpush2.bf16.msra.mxu0 0
    %343 = vmatprep.subr.bf16.mxu0 0
    %344 = vmatpush2.bf16.msra.mxu0 0
    %345 = vmatprep.subr.bf16.mxu0 0
    %346 = vmatpush2.bf16.msra.mxu0 0
    %347 = vmatprep.subr.bf16.mxu0 0
    %348 = vmatpush2.bf16.msra.mxu0 0
    %349 = vmatprep.subr.bf16.mxu0 0
    %350 = vmatpush2.bf16.msra.mxu0 0
    %351 = vmatprep.subr.bf16.mxu0 0
    %352 = vmatpush2.bf16.msra.mxu0 0
    %353 = vmatprep.subr.bf16.mxu0 0
    %354 = vmatpush2.bf16.msra.mxu0 0
    %355 = vmatprep.subr.bf16.mxu0 0
    %356 = vmatpush2.bf16.msra.mxu0 0
    %357 = vmatprep.mubr.bf16.mxu0 0
    %358 = vmatmul.mubr.bf16.gmra.mxu0 %v320
    %v359 = vpop.f32.mrf.mxu0
    %v360 = vadd.f32 0.0, %v359
    %v361 = vpop.f32.mrf.mxu0
    %v362 = vpop.f32.mrf.mxu0
    %v363 = vpop.f32.mrf.mxu0
    %364 = vdwg.mxu0
    %v365 = vpack.c.bf16 %v360, %v360
    %v367 = vsel %vm141, %v365, 0
    %v370 = vsel %vm203, %v138, 0
    %372 = vmatprep.subr.bf16.mxu0 0
    %373 = vmatpush1.bf16.msra.mxu0 0
    %374 = vmatprep.subr.bf16.mxu0 0
    %375 = vmatpush1.bf16.msra.mxu0 0
    %376 = vmatprep.subr.bf16.mxu0 0
    %377 = vmatpush1.bf16.msra.mxu0 0
    %378 = vmatprep.subr.bf16.mxu0 0
    %379 = vmatpush1.bf16.msra.mxu0 0
    %380 = vmatprep.subr.bf16.mxu0 0
    %381 = vmatpush1.bf16.msra.mxu0 0
    %382 = vmatprep.subr.bf16.mxu0 0
    %383 = vmatpush1.bf16.msra.mxu0 0
    %384 = vmatprep.subr.bf16.mxu0 0
    %385 = vmatpush1.bf16.msra.mxu0 0
    %386 = vmatprep.subr.bf16.mxu0 0
    %387 = vmatpush1.bf16.msra.mxu0 %v370
    %388 = vmatprep.subr.bf16.mxu0 0
    %389 = vmatpush2.bf16.msra.mxu0 0
    %390 = vmatprep.subr.bf16.mxu0 0
    %391 = vmatpush2.bf16.msra.mxu0 0
    %392 = vmatprep.subr.bf16.mxu0 0
    %393 = vmatpush2.bf16.msra.mxu0 0
    %394 = vmatprep.subr.bf16.mxu0 0
    %395 = vmatpush2.bf16.msra.mxu0 0
    %396 = vmatprep.subr.bf16.mxu0 0
    %397 = vmatpush2.bf16.msra.mxu0 0
    %398 = vmatprep.subr.bf16.mxu0 0
    %399 = vmatpush2.bf16.msra.mxu0 0
    %400 = vmatprep.subr.bf16.mxu0 0
    %401 = vmatpush2.bf16.msra.mxu0 0
    %402 = vmatprep.subr.bf16.mxu0 0
    %403 = vmatpush2.bf16.msra.mxu0 0
    %404 = vmatprep.mubr.bf16.mxu0 0
    %405 = vmatmul.mubr.bf16.gmra.mxu0 %v367
    %v406 = vpop.f32.mrf.mxu0
    %v407 = vadd.f32 0.0, %v406
    %v408 = vpop.f32.mrf.mxu0
    %v409 = vpop.f32.mrf.mxu0
    %v410 = vpop.f32.mrf.mxu0
    %411 = vdwg.mxu0
    %v413 = vsel %vm141, %v247, 0
    %v416 = vsel %vm203, %v137, 0
    %418 = vmatprep.subr.bf16.mxu0 0
    %419 = vmatpush1.bf16.msra.mxu0 0
    %420 = vmatprep.subr.bf16.mxu0 0
    %421 = vmatpush1.bf16.msra.mxu0 0
    %422 = vmatprep.subr.bf16.mxu0 0
    %423 = vmatpush1.bf16.msra.mxu0 0
    %424 = vmatprep.subr.bf16.mxu0 0
    %425 = vmatpush1.bf16.msra.mxu0 0
    %426 = vmatprep.subr.bf16.mxu0 0
    %427 = vmatpush1.bf16.msra.mxu0 0
    %428 = vmatprep.subr.bf16.mxu0 0
    %429 = vmatpush1.bf16.msra.mxu0 0
    %430 = vmatprep.subr.bf16.mxu0 0
    %431 = vmatpush1.bf16.msra.mxu0 0
    %432 = vmatprep.subr.bf16.mxu0 0
    %433 = vmatpush1.bf16.msra.mxu0 %v416
    %434 = vmatprep.subr.bf16.mxu0 0
    %435 = vmatpush2.bf16.msra.mxu0 0
    %436 = vmatprep.subr.bf16.mxu0 0
    %437 = vmatpush2.bf16.msra.mxu0 0
    %438 = vmatprep.subr.bf16.mxu0 0
    %439 = vmatpush2.bf16.msra.mxu0 0
    %440 = vmatprep.subr.bf16.mxu0 0
    %441 = vmatpush2.bf16.msra.mxu0 0
    %442 = vmatprep.subr.bf16.mxu0 0
    %443 = vmatpush2.bf16.msra.mxu0 0
    %444 = vmatprep.subr.bf16.mxu0 0
    %445 = vmatpush2.bf16.msra.mxu0 0
    %446 = vmatprep.subr.bf16.mxu0 0
    %447 = vmatpush2.bf16.msra.mxu0 0
    %448 = vmatprep.subr.bf16.mxu0 0
    %449 = vmatpush2.bf16.msra.mxu0 0
    %450 = vmatprep.mubr.bf16.mxu0 0
    %451 = vmatmul.mubr.bf16.gmra.mxu0 %v413
    %v452 = vpop.f32.mrf.mxu0
    %v453 = vadd.f32 %v407, %v452
    %v454 = vpop.f32.mrf.mxu0
    %v455 = vpop.f32.mrf.mxu0
    %v456 = vpop.f32.mrf.mxu0
    %457 = vdwg.mxu0
    %458 = vrot.lane.b32.xlu0 %v134, 112
    %v459 = vpop.permute.xlu0 %458
    %460 = vrot.lane.b32.xlu0 %v253, 112
    %v461 = vpop.permute.xlu0 %460
    %v463 = vsel %vm141, %v459, 0
    %v466 = vsel %vm141, %v461, 0
    %468 = vmatprep.subr.bf16.mxu0 0
    %469 = vmatpush1.bf16.xpose.msra.mxu0 0
    %470 = vmatprep.subr.bf16.mxu0 0
    %471 = vmatpush1.bf16.xpose.msra.mxu0 0
    %472 = vmatprep.subr.bf16.mxu0 0
    %473 = vmatpush1.bf16.xpose.msra.mxu0 0
    %474 = vmatprep.subr.bf16.mxu0 0
    %475 = vmatpush1.bf16.xpose.msra.mxu0 0
    %476 = vmatprep.subr.bf16.mxu0 0
    %477 = vmatpush1.bf16.xpose.msra.mxu0 0
    %478 = vmatprep.subr.bf16.mxu0 0
    %479 = vmatpush1.bf16.xpose.msra.mxu0 0
    %480 = vmatprep.subr.bf16.mxu0 0
    %481 = vmatpush1.bf16.xpose.msra.mxu0 0
    %482 = vmatprep.subr.bf16.mxu0 0
    %483 = vmatpush1.bf16.xpose.msra.mxu0 %v466
    %484 = vmatprep.subr.bf16.mxu0 0
    %485 = vmatpush2.bf16.xpose.msra.mxu0 0
    %486 = vmatprep.subr.bf16.mxu0 0
    %487 = vmatpush2.bf16.xpose.msra.mxu0 0
    %488 = vmatprep.subr.bf16.mxu0 0
    %489 = vmatpush2.bf16.xpose.msra.mxu0 0
    %490 = vmatprep.subr.bf16.mxu0 0
    %491 = vmatpush2.bf16.xpose.msra.mxu0 0
    %492 = vmatprep.subr.bf16.mxu0 0
    %493 = vmatpush2.bf16.xpose.msra.mxu0 0
    %494 = vmatprep.subr.bf16.mxu0 0
    %495 = vmatpush2.bf16.xpose.msra.mxu0 0
    %496 = vmatprep.subr.bf16.mxu0 0
    %497 = vmatpush2.bf16.xpose.msra.mxu0 0
    %498 = vmatprep.subr.bf16.mxu0 0
    %499 = vmatpush2.bf16.xpose.msra.mxu0 0
    %500 = vmatprep.mubr.bf16.mxu0 0
    %501 = vmatmul.mubr.bf16.gmra.mxu0 %v463
    %v502 = vpop.f32.mrf.mxu0
    %v503 = vadd.f32 0.0, %v502
    %v504 = vpop.f32.mrf.mxu0
    %v505 = vpop.f32.mrf.mxu0
    %v506 = vpop.f32.mrf.mxu0
    %507 = vdwg.mxu0
    %v508 = vsel %vm141, %v503, -inf
    %509 = vmax.xlane.f32.xlu0 %v508
    %v510 = vpop.xlane.xlu0 %509
    %v511 = vsub.f32 %v503, %v510
    %v512 = vmul.f32 %v511, 1.442695
    %v513 = vpow.pop %v512
    %v514 = vsel %vm141, %v513, 0.0
    %515 = vadd.xlane.f32.xlu0 %v514
    %v516 = vpop.xlane.xlu0 %515
    %v517 = vrcp.pop %v516
    %v518 = vmul.f32 %v513, %v517
    %v519 = vpack.c.bf16 %v518, %v518
    %520 = vrot.lane.b32.xlu0 %v316, 112
    %v521 = vpop.permute.xlu0 %520
    %v523 = vsel %vm141, %v519, 0
    %v526 = vsel %vm203, %v521, 0
    %528 = vmatprep.subr.bf16.mxu0 0
    %529 = vmatpush1.bf16.msra.mxu0 0
    %530 = vmatprep.subr.bf16.mxu0 0
    %531 = vmatpush1.bf16.msra.mxu0 0
    %532 = vmatprep.subr.bf16.mxu0 0
    %533 = vmatpush1.bf16.msra.mxu0 0
    %534 = vmatprep.subr.bf16.mxu0 0
    %535 = vmatpush1.bf16.msra.mxu0 0
    %536 = vmatprep.subr.bf16.mxu0 0
    %537 = vmatpush1.bf16.msra.mxu0 0
    %538 = vmatprep.subr.bf16.mxu0 0
    %539 = vmatpush1.bf16.msra.mxu0 0
    %540 = vmatprep.subr.bf16.mxu0 0
    %541 = vmatpush1.bf16.msra.mxu0 0
    %542 = vmatprep.subr.bf16.mxu0 0
    %543 = vmatpush1.bf16.msra.mxu0 %v526
    %544 = vmatprep.subr.bf16.mxu0 0
    %545 = vmatpush2.bf16.msra.mxu0 0
    %546 = vmatprep.subr.bf16.mxu0 0
    %547 = vmatpush2.bf16.msra.mxu0 0
    %548 = vmatprep.subr.bf16.mxu0 0
    %549 = vmatpush2.bf16.msra.mxu0 0
    %550 = vmatprep.subr.bf16.mxu0 0
    %551 = vmatpush2.bf16.msra.mxu0 0
    %552 = vmatprep.subr.bf16.mxu0 0
    %553 = vmatpush2.bf16.msra.mxu0 0
    %554 = vmatprep.subr.bf16.mxu0 0
    %555 = vmatpush2.bf16.msra.mxu0 0
    %556 = vmatprep.subr.bf16.mxu0 0
    %557 = vmatpush2.bf16.msra.mxu0 0
    %558 = vmatprep.subr.bf16.mxu0 0
    %559 = vmatpush2.bf16.msra.mxu0 0
    %560 = vmatprep.mubr.bf16.mxu0 0
    %561 = vmatmul.mubr.bf16.gmra.mxu0 %v523
    %v562 = vpop.f32.mrf.mxu0
    %v563 = vadd.f32 0.0, %v562
    %v564 = vpop.f32.mrf.mxu0
    %v565 = vpop.f32.mrf.mxu0
    %v566 = vpop.f32.mrf.mxu0
    %567 = vdwg.mxu0
    %v568 = vpack.c.bf16 %v563, %v563
    %v570 = vsel %vm141, %v568, 0
    %v573 = vsel %vm203, %v139, 0
    %575 = vmatprep.subr.bf16.mxu0 0
    %576 = vmatpush1.bf16.msra.mxu0 0
    %577 = vmatprep.subr.bf16.mxu0 0
    %578 = vmatpush1.bf16.msra.mxu0 0
    %579 = vmatprep.subr.bf16.mxu0 0
    %580 = vmatpush1.bf16.msra.mxu0 0
    %581 = vmatprep.subr.bf16.mxu0 0
    %582 = vmatpush1.bf16.msra.mxu0 0
    %583 = vmatprep.subr.bf16.mxu0 0
    %584 = vmatpush1.bf16.msra.mxu0 0
    %585 = vmatprep.subr.bf16.mxu0 0
    %586 = vmatpush1.bf16.msra.mxu0 0
    %587 = vmatprep.subr.bf16.mxu0 0
    %588 = vmatpush1.bf16.msra.mxu0 0
    %589 = vmatprep.subr.bf16.mxu0 0
    %590 = vmatpush1.bf16.msra.mxu0 %v573
    %591 = vmatprep.subr.bf16.mxu0 0
    %592 = vmatpush2.bf16.msra.mxu0 0
    %593 = vmatprep.subr.bf16.mxu0 0
    %594 = vmatpush2.bf16.msra.mxu0 0
    %595 = vmatprep.subr.bf16.mxu0 0
    %596 = vmatpush2.bf16.msra.mxu0 0
    %597 = vmatprep.subr.bf16.mxu0 0
    %598 = vmatpush2.bf16.msra.mxu0 0
    %599 = vmatprep.subr.bf16.mxu0 0
    %600 = vmatpush2.bf16.msra.mxu0 0
    %601 = vmatprep.subr.bf16.mxu0 0
    %602 = vmatpush2.bf16.msra.mxu0 0
    %603 = vmatprep.subr.bf16.mxu0 0
    %604 = vmatpush2.bf16.msra.mxu0 0
    %605 = vmatprep.subr.bf16.mxu0 0
    %606 = vmatpush2.bf16.msra.mxu0 0
    %607 = vmatprep.mubr.bf16.mxu0 0
    %608 = vmatmul.mubr.bf16.gmra.mxu0 %v570
    %v609 = vpop.f32.mrf.mxu0
    %v610 = vadd.f32 0.0, %v609
    %v611 = vpop.f32.mrf.mxu0
    %v612 = vpop.f32.mrf.mxu0
    %v613 = vpop.f32.mrf.mxu0
    %614 = vdwg.mxu0
    %v615 = vadd.f32 %v453, %v610
    %616 = vrot.lane.b32.xlu0 %v134, 104
    %v617 = vpop.permute.xlu0 %616
    %618 = vrot.lane.b32.xlu0 %v253, 104
    %v619 = vpop.permute.xlu0 %618
    %v621 = vsel %vm141, %v617, 0
    %v624 = vsel %vm141, %v619, 0
    %626 = vmatprep.subr.bf16.mxu0 0
    %627 = vmatpush1.bf16.xpose.msra.mxu0 0
    %628 = vmatprep.subr.bf16.mxu0 0
    %629 = vmatpush1.bf16.xpose.msra.mxu0 0
    %630 = vmatprep.subr.bf16.mxu0 0
    %631 = vmatpush1.bf16.xpose.msra.mxu0 0
    %632 = vmatprep.subr.bf16.mxu0 0
    %633 = vmatpush1.bf16.xpose.msra.mxu0 0
    %634 = vmatprep.subr.bf16.mxu0 0
    %635 = vmatpush1.bf16.xpose.msra.mxu0 0
    %636 = vmatprep.subr.bf16.mxu0 0
    %637 = vmatpush1.bf16.xpose.msra.mxu0 0
    %638 = vmatprep.subr.bf16.mxu0 0
    %639 = vmatpush1.bf16.xpose.msra.mxu0 0
    %640 = vmatprep.subr.bf16.mxu0 0
    %641 = vmatpush1.bf16.xpose.msra.mxu0 %v624
    %642 = vmatprep.subr.bf16.mxu0 0
    %643 = vmatpush2.bf16.xpose.msra.mxu0 0
    %644 = vmatprep.subr.bf16.mxu0 0
    %645 = vmatpush2.bf16.xpose.msra.mxu0 0
    %646 = vmatprep.subr.bf16.mxu0 0
    %647 = vmatpush2.bf16.xpose.msra.mxu0 0
    %648 = vmatprep.subr.bf16.mxu0 0
    %649 = vmatpush2.bf16.xpose.msra.mxu0 0
    %650 = vmatprep.subr.bf16.mxu0 0
    %651 = vmatpush2.bf16.xpose.msra.mxu0 0
    %652 = vmatprep.subr.bf16.mxu0 0
    %653 = vmatpush2.bf16.xpose.msra.mxu0 0
    %654 = vmatprep.subr.bf16.mxu0 0
    %655 = vmatpush2.bf16.xpose.msra.mxu0 0
    %656 = vmatprep.subr.bf16.mxu0 0
    %657 = vmatpush2.bf16.xpose.msra.mxu0 0
    %658 = vmatprep.mubr.bf16.mxu0 0
    %659 = vmatmul.mubr.bf16.gmra.mxu0 %v621
    %v660 = vpop.f32.mrf.mxu0
    %v661 = vadd.f32 0.0, %v660
    %v662 = vpop.f32.mrf.mxu0
    %v663 = vpop.f32.mrf.mxu0
    %v664 = vpop.f32.mrf.mxu0
    %665 = vdwg.mxu0
    %v666 = vsel %vm141, %v661, -inf
    %667 = vmax.xlane.f32.xlu0 %v666
    %v668 = vpop.xlane.xlu0 %667
    %v669 = vsub.f32 %v661, %v668
    %v670 = vmul.f32 %v669, 1.442695
    %v671 = vpow.pop %v670
    %v672 = vsel %vm141, %v671, 0.0
    %673 = vadd.xlane.f32.xlu0 %v672
    %v674 = vpop.xlane.xlu0 %673
    %v675 = vrcp.pop %v674
    %v676 = vmul.f32 %v671, %v675
    %v677 = vpack.c.bf16 %v676, %v676
    %678 = vrot.lane.b32.xlu0 %v316, 104
    %v679 = vpop.permute.xlu0 %678
    %v681 = vsel %vm141, %v677, 0
    %v684 = vsel %vm203, %v679, 0
    %686 = vmatprep.subr.bf16.mxu0 0
    %687 = vmatpush1.bf16.msra.mxu0 0
    %688 = vmatprep.subr.bf16.mxu0 0
    %689 = vmatpush1.bf16.msra.mxu0 0
    %690 = vmatprep.subr.bf16.mxu0 0
    %691 = vmatpush1.bf16.msra.mxu0 0
    %692 = vmatprep.subr.bf16.mxu0 0
    %693 = vmatpush1.bf16.msra.mxu0 0
    %694 = vmatprep.subr.bf16.mxu0 0
    %695 = vmatpush1.bf16.msra.mxu0 0
    %696 = vmatprep.subr.bf16.mxu0 0
    %697 = vmatpush1.bf16.msra.mxu0 0
    %698 = vmatprep.subr.bf16.mxu0 0
    %699 = vmatpush1.bf16.msra.mxu0 0
    %700 = vmatprep.subr.bf16.mxu0 0
    %701 = vmatpush1.bf16.msra.mxu0 %v684
    %702 = vmatprep.subr.bf16.mxu0 0
    %703 = vmatpush2.bf16.msra.mxu0 0
    %704 = vmatprep.subr.bf16.mxu0 0
    %705 = vmatpush2.bf16.msra.mxu0 0
    %706 = vmatprep.subr.bf16.mxu0 0
    %707 = vmatpush2.bf16.msra.mxu0 0
    %708 = vmatprep.subr.bf16.mxu0 0
    %709 = vmatpush2.bf16.msra.mxu0 0
    %710 = vmatprep.subr.bf16.mxu0 0
    %711 = vmatpush2.bf16.msra.mxu0 0
    %712 = vmatprep.subr.bf16.mxu0 0
    %713 = vmatpush2.bf16.msra.mxu0 0
    %714 = vmatprep.subr.bf16.mxu0 0
    %715 = vmatpush2.bf16.msra.mxu0 0
    %716 = vmatprep.subr.bf16.mxu0 0
    %717 = vmatpush2.bf16.msra.mxu0 0
    %718 = vmatprep.mubr.bf16.mxu0 0
    %719 = vmatmul.mubr.bf16.gmra.mxu0 %v681
    %v720 = vpop.f32.mrf.mxu0
    %v721 = vadd.f32 0.0, %v720
    %v722 = vpop.f32.mrf.mxu0
    %v723 = vpop.f32.mrf.mxu0
    %v724 = vpop.f32.mrf.mxu0
    %725 = vdwg.mxu0
    %v726 = vpack.c.bf16 %v721, %v721
    %v728 = vsel %vm141, %v726, 0
    %v731 = vsel %vm203, %v140, 0
    %733 = vmatprep.subr.bf16.mxu0 0
    %734 = vmatpush1.bf16.msra.mxu0 0
    %735 = vmatprep.subr.bf16.mxu0 0
    %736 = vmatpush1.bf16.msra.mxu0 0
    %737 = vmatprep.subr.bf16.mxu0 0
    %738 = vmatpush1.bf16.msra.mxu0 0
    %739 = vmatprep.subr.bf16.mxu0 0
    %740 = vmatpush1.bf16.msra.mxu0 0
    %741 = vmatprep.subr.bf16.mxu0 0
    %742 = vmatpush1.bf16.msra.mxu0 0
    %743 = vmatprep.subr.bf16.mxu0 0
    %744 = vmatpush1.bf16.msra.mxu0 0
    %745 = vmatprep.subr.bf16.mxu0 0
    %746 = vmatpush1.bf16.msra.mxu0 0
    %747 = vmatprep.subr.bf16.mxu0 0
    %748 = vmatpush1.bf16.msra.mxu0 %v731
    %749 = vmatprep.subr.bf16.mxu0 0
    %750 = vmatpush2.bf16.msra.mxu0 0
    %751 = vmatprep.subr.bf16.mxu0 0
    %752 = vmatpush2.bf16.msra.mxu0 0
    %753 = vmatprep.subr.bf16.mxu0 0
    %754 = vmatpush2.bf16.msra.mxu0 0
    %755 = vmatprep.subr.bf16.mxu0 0
    %756 = vmatpush2.bf16.msra.mxu0 0
    %757 = vmatprep.subr.bf16.mxu0 0
    %758 = vmatpush2.bf16.msra.mxu0 0
    %759 = vmatprep.subr.bf16.mxu0 0
    %760 = vmatpush2.bf16.msra.mxu0 0
    %761 = vmatprep.subr.bf16.mxu0 0
    %762 = vmatpush2.bf16.msra.mxu0 0
    %763 = vmatprep.subr.bf16.mxu0 0
    %764 = vmatpush2.bf16.msra.mxu0 0
    %765 = vmatprep.mubr.bf16.mxu0 0
    %766 = vmatmul.mubr.bf16.gmra.mxu0 %v728
    %v767 = vpop.f32.mrf.mxu0
    %v768 = vadd.f32 0.0, %v767
    %v769 = vpop.f32.mrf.mxu0
    %v770 = vpop.f32.mrf.mxu0
    %v771 = vpop.f32.mrf.mxu0
    %772 = vdwg.mxu0
    %v773 = vadd.f32 %v615, %v768
    %774 = vst.msk [vmem:[#allocation10] sm:$0xff] %vm90, %v773
    // Predicated region
    $region38: #{tpu_custom_call.1} parent=1 // pred_check
      _
    $region39: #{tpu_custom_call.1} parent=1 // pred_check_branch
      %776 = sbr.rel (0) target = $region41
    $region40: #{tpu_custom_call.1} parent=1 // pred_region
      %s778 = ssub.s32 128, 128
      %779 = vsyncadd [#allocation4], %s778
      %s781 = sshll.u32 [#allocation10], 4
      %s782 = int_to_ptr.vmem [resolvable:$true] %s781
      %784 = dma.vmem_to_hbm [thread:$0]  %s782, 128, %s5, [#allocation4]
    $region41: #{tpu_custom_call.1} parent=1 // pred_fallthru
      _
    // Predicated region
    $region42: #{tpu_custom_call.1} parent=1 // pred_check
      _
    $region43: #{tpu_custom_call.1} parent=1 // pred_check_branch
      %786 = sbr.rel (0) target = $region45
    $region44: #{tpu_custom_call.1} parent=1 // pred_region
      %787 = dma.done [#allocation4], 128
    $region45: #{tpu_custom_call.1} parent=1 // pred_fallthru
      _
    %788 = vsyncpa [#allocation3], 1
    %789 = vsyncpa [#allocation6], 1
    %790 = vsyncpa [#allocation9], 1
    %791 = vsyncpa [#allocation4], 1

</llo_original>
